<compile_context>
chip_gen: v7x
topology: tpu7x:2x2x1
jax: 0.10.0
libtpu: 0.0.40
codegen_flags: <defaults>
</compile_context>

<pallas_src>
import functools

import jax
import jax.numpy as jnp
from jax.experimental import pallas as pl
from jax.experimental.pallas import tpu as pltpu  # noqa: F401  (kept for TPU-specific tuning)


# ----------------------------------------------------------------------------
# Fused Pallas kernel: all LSTM layers (bidirectional) + fc + log_softmax
# ----------------------------------------------------------------------------
def _soffritto_kernel(*refs, num_layers):
    """refs = (x, [wih_il, whh_il, b_il] * num_layers, fc_w, fc_b, out)

    x       : (L, D_in)
    wih_il  : (D_in, 8H)  input->gate weights, columns interleaved per gate: for gate m
              (PyTorch order i,f,g,o) cols [2mH, 2mH+H) = forward, [2mH+H, 2(m+1)H) = reverse.
    whh_il  : (2H, 8H)    hidden->gate weights, block structured: rows [0,H) = W_hh_f placed
              only in forward columns, rows [H,2H) = W_hh_r placed only in reverse columns.
    b_il    : (1, 8H)     (b_ih + b_hh), same interleaved column layout.
    fc_w    : (2H, O), fc_b: (1, O)
    out     : (L, O)
    """
    x_ref = refs[0]
    lstm_refs = refs[1:1 + 3 * num_layers]
    fc_w_ref, fc_b_ref, out_ref = refs[1 + 3 * num_layers:]

    L = x_ref.shape[0]
    H = lstm_refs[1].shape[0] // 2          # whh_il is (2H, 8H)

    cur = x_ref[...]                                            # (L, D_in) value
    for layer in range(num_layers):
        wih_ref, whh_ref, b_ref = lstm_refs[3 * layer:3 * layer + 3]
        whh = whh_ref[...]                                      # (2H, 8H), loaded once

        # Input->gate pre-activations for BOTH directions in one MXU matmul (interleaved cols).
        xg = (jnp.dot(cur, wih_ref[...], preferred_element_type=jnp.float32)
              + b_ref[...])                                     # (L, 8H)

        # Pre-gather the per-step (2, 8H) input tiles OFF the recurrent chain:
        # row 0 = preacts at time t (forward lanes valid), row 1 = preacts at time L-1-t
        # (reverse lanes valid).  Inactive half-lanes are harmless junk (see header note).
        gx = [jnp.concatenate([xg[t:t + 1, :], xg[L - 1 - t:L - t, :]], axis=0)
              for t in range(L)]

        # Diagonal-layout state: row 0 lanes [0,H) = forward h/c, row 1 lanes [H,2H) = reverse.
        h = jnp.zeros((2, 2 * H), jnp.float32)
        c = jnp.zeros((2, 2 * H), jnp.float32)
        hs = []

        # Fully-unrolled serial recurrence (L is small & static).  ONE matmul per step, no
        # per-step packing/masking: the block-structured whh guarantees junk lanes of h can
        # only influence junk output columns.
        for t in range(L):
            g = gx[t] + jnp.dot(h, whh, preferred_element_type=jnp.float32)  # (2, 8H)
            sif = jax.nn.sigmoid(g[:, 0:4 * H])                 # i | f in one wide EUP tile
            i_d = sif[:, 0:2 * H]
            f_d = sif[:, 2 * H:4 * H]
            g_d = jnp.tanh(g[:, 4 * H:6 * H])
            o_d = jax.nn.sigmoid(g[:, 6 * H:8 * H])

            c = f_d * c + i_d * g_d
            h = o_d * jnp.tanh(c)
            hs.append(h)

        # Assemble the (L, 2H) bidirectional layer output from register-carried values:
        # forward hidden of time t = hs[t][0, 0:H]; reverse hidden of time t = hs[L-1-t][1, H:2H].
        fwd = jnp.concatenate([hs[t][0:1, 0:H] for t in range(L)], axis=0)          # (L, H)
        rev = jnp.concatenate([hs[L - 1 - t][1:2, H:2 * H] for t in range(L)], axis=0)
        cur = jnp.concatenate([fwd, rev], axis=1)               # (L, 2H) input to next layer

    # Fused epilogue: fc + log_softmax.
    z = (jnp.dot(cur, fc_w_ref[...], preferred_element_type=jnp.float32)
         + fc_b_ref[...])                                       # (L, O)
    z = z - jnp.max(z, axis=-1, keepdims=True)
    out_ref[...] = z - jnp.log(jnp.sum(jnp.exp(z), axis=-1, keepdims=True))


# ----------------------------------------------------------------------------
# Host-side weight packing into the interleaved / block-diagonal layouts
# ----------------------------------------------------------------------------
def _pack_lstm_params(params):
    H = params["lstm"][0][0][1].shape[0]            # whh_f is (H, 4H)
    packed = []
    for (wih_f, whh_f, b_f), (wih_r, whh_r, b_r) in params["lstm"]:
        d_in = wih_f.shape[0]
        # Interleave gate columns: [..., gate m fwd H, gate m rev H, ...]
        wih_il = jnp.concatenate(
            [wih_f.reshape(d_in, 4, H), wih_r.reshape(d_in, 4, H)], axis=-1
        ).reshape(d_in, 8 * H)
        zero = jnp.zeros((H, 4, H), jnp.float32)
        top = jnp.concatenate([whh_f.reshape(H, 4, H), zero], axis=-1)   # fwd rows -> fwd cols
        bot = jnp.concatenate([zero, whh_r.reshape(H, 4, H)], axis=-1)   # rev rows -> rev cols
        whh_il = jnp.concatenate([top, bot], axis=0).reshape(2 * H, 8 * H)
        b_il = jnp.concatenate(
            [b_f.reshape(4, H), b_r.reshape(4, H)], axis=-1
        ).reshape(1, 8 * H)
        packed.append((wih_il, whh_il, b_il))
    return packed


# ----------------------------------------------------------------------------
# Wrapper (pallas_call plumbing) — single fused call, no grid, no scratch
# ----------------------------------------------------------------------------
def _full_spec(shape):
    return pl.BlockSpec(shape, lambda: (0,) * len(shape))


def soffritto_forward(x, params, num_layers):
    L = x.shape[0]
    O = params["fc_w"].shape[1]
    packed = _pack_lstm_params(params)

    flat_inputs = [x]
    in_specs = [_full_spec(x.shape)]
    for tup in packed:
        for a in tup:
            flat_inputs.append(a)
            in_specs.append(_full_spec(a.shape))
    for a in (params["fc_w"], params["fc_b"]):
        flat_inputs.append(a)
        in_specs.append(_full_spec(a.shape))

    kernel = functools.partial(_soffritto_kernel, num_layers=num_layers)
    return pl.pallas_call(
        kernel,
        out_shape=jax.ShapeDtypeStruct((L, O), jnp.float32),
        in_specs=in_specs,
        out_specs=_full_spec((L, O)),
    )(*flat_inputs)


# ----------------------------------------------------------------------------
# Pure-JAX reference (for correctness check)
# ----------------------------------------------------------------------------
def _reference_forward(x, params, num_layers):
    HIGH = jax.lax.Precision.HIGHEST
    H = params["lstm"][0][0][1].shape[0]
    out = x
    for layer in range(num_layers):
        (wih_f, whh_f, b_f), (wih_r, whh_r, b_r) = params["lstm"][layer]
        L = out.shape[0]

        def run_dir(wih, whh, b, reverse):
            xg = jnp.dot(out, wih, precision=HIGH) + b          # (L, 4H)
            order = range(L - 1, -1, -1) if reverse else range(L)
            h = jnp.zeros((H,), jnp.float32)
            c = jnp.zeros((H,), jnp.float32)
            ys = [None] * L
            for t in order:
                g = xg[t] + jnp.dot(h, whh, precision=HIGH)
                i = jax.nn.sigmoid(g[0:H])
                f = jax.nn.sigmoid(g[H:2 * H])
                gg = jnp.tanh(g[2 * H:3 * H])
                o = jax.nn.sigmoid(g[3 * H:4 * H])
                c = f * c + i * gg
                h = o * jnp.tanh(c)
                ys[t] = h
            return jnp.stack(ys, axis=0)

        fwd = run_dir(wih_f, whh_f, b_f, reverse=False)
        rev = run_dir(wih_r, whh_r, b_r, reverse=True)
        out = jnp.concatenate([fwd, rev], axis=1)
    z = jnp.dot(out, params["fc_w"], precision=HIGH) + params["fc_b"]
    return jax.nn.log_softmax(z, axis=-1)


# ----------------------------------------------------------------------------
# Deterministic parameter init (PyTorch shapes; uniform(-1/sqrt(H), 1/sqrt(H)))
# ----------------------------------------------------------------------------
def init_params(key, input_size, hidden_size, num_layers, output_size):
    H = hidden_size
    k = 1.0 / jnp.sqrt(jnp.float32(H))
    layers = []
    for layer in range(num_layers):
        d_in = input_size if layer == 0 else 2 * H
        dirs = []
        for _ in range(2):  # forward, reverse
            key, k1, k2, k3, k4 = jax.random.split(key, 5)
            w_ih = jax.random.uniform(k1, (4 * H, d_in), jnp.float32, -k, k)
            w_hh = jax.random.uniform(k2, (4 * H, H), jnp.float32, -k, k)
            b_ih = jax.random.uniform(k3, (4 * H,), jnp.float32, -k, k)
            b_hh = jax.random.uniform(k4, (4 * H,), jnp.float32, -k, k)
            dirs.append((w_ih.T, w_hh.T, b_ih + b_hh))   # (d_in,4H), (H,4H), (4H,)
        layers.append(tuple(dirs))
    key, k1, k2 = jax.random.split(key, 3)
    kf = 1.0 / jnp.sqrt(jnp.float32(2 * H))
    fc_w = jax.random.uniform(k1, (output_size, 2 * H), jnp.float32, -kf, kf)
    fc_b = jax.random.uniform(k2, (output_size,), jnp.float32, -kf, kf)
    return {"lstm": layers, "fc_w": fc_w.T, "fc_b": fc_b[None, :]}


# ----------------------------------------------------------------------------
if __name__ == "__main__":
    SEQ_LEN = 8
    INPUT_SIZE = 32
    HIDDEN_SIZE = 32
    NUM_LAYERS = 2
    OUTPUT_SIZE = 16

    root = jax.random.PRNGKey(0)
    k_param, k_x = jax.random.split(root)

    params = init_params(k_param, INPUT_SIZE, HIDDEN_SIZE, NUM_LAYERS, OUTPUT_SIZE)
    x = jax.random.normal(k_x, (SEQ_LEN, INPUT_SIZE), jnp.float32)

    fwd = jax.jit(functools.partial(soffritto_forward, num_layers=NUM_LAYERS))
    out = jax.block_until_ready(fwd(x, params))

    assert out.shape == (SEQ_LEN, OUTPUT_SIZE)
    # log_softmax rows must exponentiate-sum to ~1
    assert bool(jnp.all(jnp.abs(jnp.sum(jnp.exp(out), axis=-1) - 1.0) < 1e-4))
    # compare against pure-JAX reference
    ref_out = jax.jit(functools.partial(_reference_forward, num_layers=NUM_LAYERS))(x, params)
    assert bool(jnp.allclose(out, ref_out, atol=1e-3, rtol=1e-3)), "mismatch vs reference"

    print("KERNEL_OK")
</pallas_src>

<mosaic_0001>
module attributes {stable_mosaic.version = 11 : i64} {
  func.func @_soffritto_kernel(%arg0: memref<8x32xf32, #tpu.memory_space<vmem>>, %arg1: memref<32x256xf32, #tpu.memory_space<vmem>>, %arg2: memref<64x256xf32, #tpu.memory_space<vmem>>, %arg3: memref<1x256xf32, #tpu.memory_space<vmem>>, %arg4: memref<64x256xf32, #tpu.memory_space<vmem>>, %arg5: memref<64x256xf32, #tpu.memory_space<vmem>>, %arg6: memref<1x256xf32, #tpu.memory_space<vmem>>, %arg7: memref<64x16xf32, #tpu.memory_space<vmem>>, %arg8: memref<1x16xf32, #tpu.memory_space<vmem>>, %arg9: memref<8x16xf32, #tpu.memory_space<vmem>>) attributes {dimension_semantics = [], scalar_prefetch = 0 : i64, scratch_operands = 0 : i64, tpu.core_type = #tpu.core_type<tc>} {
    %c0 = arith.constant 0 : index
    %c0_0 = arith.constant 0 : index
    %0 = vector.load %arg0[%c0, %c0_0] : memref<8x32xf32, #tpu.memory_space<vmem>>, vector<8x32xf32>
    %c0_1 = arith.constant 0 : index
    %c0_2 = arith.constant 0 : index
    %1 = vector.load %arg2[%c0_1, %c0_2] : memref<64x256xf32, #tpu.memory_space<vmem>>, vector<64x256xf32>
    %c0_3 = arith.constant 0 : index
    %c0_4 = arith.constant 0 : index
    %2 = vector.load %arg1[%c0_3, %c0_4] : memref<32x256xf32, #tpu.memory_space<vmem>>, vector<32x256xf32>
    %cst = arith.constant dense<0.000000e+00> : vector<8x256xf32>
    %3 = tpu.matmul %0, %2, %cst {dimension_numbers = #tpu.dot_dimension_numbers<[1], [0], [0], [1], [0, 0, 1, 1], [], []>} : vector<8x32xf32>, vector<32x256xf32>, vector<8x256xf32> -> vector<8x256xf32>
    %c0_5 = arith.constant 0 : index
    %c0_6 = arith.constant 0 : index
    %4 = vector.load %arg3[%c0_5, %c0_6] : memref<1x256xf32, #tpu.memory_space<vmem>>, vector<1x256xf32>
    %5 = vector.broadcast %4 : vector<1x256xf32> to vector<8x256xf32>
    %6 = arith.addf %3, %5 : vector<8x256xf32>
    %7 = vector.extract_strided_slice %6 {offsets = [0, 0], sizes = [1, 256], strides = [1, 1]} : vector<8x256xf32> to vector<1x256xf32>
    %8 = vector.extract_strided_slice %6 {offsets = [7, 0], sizes = [1, 256], strides = [1, 1]} : vector<8x256xf32> to vector<1x256xf32>
    %9 = tpu.concatenate %7, %8 in 0 : vector<1x256xf32>, vector<1x256xf32> -> vector<2x256xf32>
    %10 = vector.extract_strided_slice %6 {offsets = [1, 0], sizes = [1, 256], strides = [1, 1]} : vector<8x256xf32> to vector<1x256xf32>
    %11 = vector.extract_strided_slice %6 {offsets = [6, 0], sizes = [1, 256], strides = [1, 1]} : vector<8x256xf32> to vector<1x256xf32>
    %12 = tpu.concatenate %10, %11 in 0 : vector<1x256xf32>, vector<1x256xf32> -> vector<2x256xf32>
    %13 = vector.extract_strided_slice %6 {offsets = [2, 0], sizes = [1, 256], strides = [1, 1]} : vector<8x256xf32> to vector<1x256xf32>
    %14 = vector.extract_strided_slice %6 {offsets = [5, 0], sizes = [1, 256], strides = [1, 1]} : vector<8x256xf32> to vector<1x256xf32>
    %15 = tpu.concatenate %13, %14 in 0 : vector<1x256xf32>, vector<1x256xf32> -> vector<2x256xf32>
    %16 = vector.extract_strided_slice %6 {offsets = [3, 0], sizes = [1, 256], strides = [1, 1]} : vector<8x256xf32> to vector<1x256xf32>
    %17 = vector.extract_strided_slice %6 {offsets = [4, 0], sizes = [1, 256], strides = [1, 1]} : vector<8x256xf32> to vector<1x256xf32>
    %18 = tpu.concatenate %16, %17 in 0 : vector<1x256xf32>, vector<1x256xf32> -> vector<2x256xf32>
    %19 = vector.extract_strided_slice %6 {offsets = [4, 0], sizes = [1, 256], strides = [1, 1]} : vector<8x256xf32> to vector<1x256xf32>
    %20 = vector.extract_strided_slice %6 {offsets = [3, 0], sizes = [1, 256], strides = [1, 1]} : vector<8x256xf32> to vector<1x256xf32>
    %21 = tpu.concatenate %19, %20 in 0 : vector<1x256xf32>, vector<1x256xf32> -> vector<2x256xf32>
    %22 = vector.extract_strided_slice %6 {offsets = [5, 0], sizes = [1, 256], strides = [1, 1]} : vector<8x256xf32> to vector<1x256xf32>
    %23 = vector.extract_strided_slice %6 {offsets = [2, 0], sizes = [1, 256], strides = [1, 1]} : vector<8x256xf32> to vector<1x256xf32>
    %24 = tpu.concatenate %22, %23 in 0 : vector<1x256xf32>, vector<1x256xf32> -> vector<2x256xf32>
    %25 = vector.extract_strided_slice %6 {offsets = [6, 0], sizes = [1, 256], strides = [1, 1]} : vector<8x256xf32> to vector<1x256xf32>
    %26 = vector.extract_strided_slice %6 {offsets = [1, 0], sizes = [1, 256], strides = [1, 1]} : vector<8x256xf32> to vector<1x256xf32>
    %27 = tpu.concatenate %25, %26 in 0 : vector<1x256xf32>, vector<1x256xf32> -> vector<2x256xf32>
    %28 = vector.extract_strided_slice %6 {offsets = [7, 0], sizes = [1, 256], strides = [1, 1]} : vector<8x256xf32> to vector<1x256xf32>
    %29 = vector.extract_strided_slice %6 {offsets = [0, 0], sizes = [1, 256], strides = [1, 1]} : vector<8x256xf32> to vector<1x256xf32>
    %30 = tpu.concatenate %28, %29 in 0 : vector<1x256xf32>, vector<1x256xf32> -> vector<2x256xf32>
    %cst_7 = arith.constant 0.000000e+00 : f32
    %31 = vector.broadcast %cst_7 : f32 to vector<2x64xf32>
    %cst_8 = arith.constant 0.000000e+00 : f32
    %32 = vector.broadcast %cst_8 : f32 to vector<2x64xf32>
    %cst_9 = arith.constant dense<0.000000e+00> : vector<2x256xf32>
    %33 = tpu.matmul %31, %1, %cst_9 {dimension_numbers = #tpu.dot_dimension_numbers<[1], [0], [0], [1], [0, 0, 1, 1], [], []>} : vector<2x64xf32>, vector<64x256xf32>, vector<2x256xf32> -> vector<2x256xf32>
    %34 = arith.addf %9, %33 : vector<2x256xf32>
    %35 = vector.extract_strided_slice %34 {offsets = [0, 0], sizes = [2, 128], strides = [1, 1]} : vector<2x256xf32> to vector<2x128xf32>
    %36 = arith.negf %35 : vector<2x128xf32>
    %37 = math.exp %36 : vector<2x128xf32>
    %cst_10 = arith.constant 1.000000e+00 : f32
    %38 = vector.broadcast %cst_10 : f32 to vector<2x128xf32>
    %39 = arith.addf %38, %37 : vector<2x128xf32>
    %40 = arith.divf %38, %39 : vector<2x128xf32>
    %41 = vector.extract_strided_slice %40 {offsets = [0, 0], sizes = [2, 64], strides = [1, 1]} : vector<2x128xf32> to vector<2x64xf32>
    %42 = vector.extract_strided_slice %40 {offsets = [0, 64], sizes = [2, 64], strides = [1, 1]} : vector<2x128xf32> to vector<2x64xf32>
    %43 = vector.extract_strided_slice %34 {offsets = [0, 128], sizes = [2, 64], strides = [1, 1]} : vector<2x256xf32> to vector<2x64xf32>
    %44 = math.tanh %43 : vector<2x64xf32>
    %45 = vector.extract_strided_slice %34 {offsets = [0, 192], sizes = [2, 64], strides = [1, 1]} : vector<2x256xf32> to vector<2x64xf32>
    %46 = arith.negf %45 : vector<2x64xf32>
    %47 = math.exp %46 : vector<2x64xf32>
    %cst_11 = arith.constant 1.000000e+00 : f32
    %48 = vector.broadcast %cst_11 : f32 to vector<2x64xf32>
    %49 = arith.addf %48, %47 : vector<2x64xf32>
    %50 = arith.divf %48, %49 : vector<2x64xf32>
    %51 = arith.mulf %42, %32 : vector<2x64xf32>
    %52 = arith.mulf %41, %44 : vector<2x64xf32>
    %53 = arith.addf %51, %52 : vector<2x64xf32>
    %54 = math.tanh %53 : vector<2x64xf32>
    %55 = arith.mulf %50, %54 : vector<2x64xf32>
    %cst_12 = arith.constant dense<0.000000e+00> : vector<2x256xf32>
    %56 = tpu.matmul %55, %1, %cst_12 {dimension_numbers = #tpu.dot_dimension_numbers<[1], [0], [0], [1], [0, 0, 1, 1], [], []>} : vector<2x64xf32>, vector<64x256xf32>, vector<2x256xf32> -> vector<2x256xf32>
    %57 = arith.addf %12, %56 : vector<2x256xf32>
    %58 = vector.extract_strided_slice %57 {offsets = [0, 0], sizes = [2, 128], strides = [1, 1]} : vector<2x256xf32> to vector<2x128xf32>
    %59 = arith.negf %58 : vector<2x128xf32>
    %60 = math.exp %59 : vector<2x128xf32>
    %cst_13 = arith.constant 1.000000e+00 : f32
    %61 = vector.broadcast %cst_13 : f32 to vector<2x128xf32>
    %62 = arith.addf %61, %60 : vector<2x128xf32>
    %63 = arith.divf %61, %62 : vector<2x128xf32>
    %64 = vector.extract_strided_slice %63 {offsets = [0, 0], sizes = [2, 64], strides = [1, 1]} : vector<2x128xf32> to vector<2x64xf32>
    %65 = vector.extract_strided_slice %63 {offsets = [0, 64], sizes = [2, 64], strides = [1, 1]} : vector<2x128xf32> to vector<2x64xf32>
    %66 = vector.extract_strided_slice %57 {offsets = [0, 128], sizes = [2, 64], strides = [1, 1]} : vector<2x256xf32> to vector<2x64xf32>
    %67 = math.tanh %66 : vector<2x64xf32>
    %68 = vector.extract_strided_slice %57 {offsets = [0, 192], sizes = [2, 64], strides = [1, 1]} : vector<2x256xf32> to vector<2x64xf32>
    %69 = arith.negf %68 : vector<2x64xf32>
    %70 = math.exp %69 : vector<2x64xf32>
    %cst_14 = arith.constant 1.000000e+00 : f32
    %71 = vector.broadcast %cst_14 : f32 to vector<2x64xf32>
    %72 = arith.addf %71, %70 : vector<2x64xf32>
    %73 = arith.divf %71, %72 : vector<2x64xf32>
    %74 = arith.mulf %65, %53 : vector<2x64xf32>
    %75 = arith.mulf %64, %67 : vector<2x64xf32>
    %76 = arith.addf %74, %75 : vector<2x64xf32>
    %77 = math.tanh %76 : vector<2x64xf32>
    %78 = arith.mulf %73, %77 : vector<2x64xf32>
    %cst_15 = arith.constant dense<0.000000e+00> : vector<2x256xf32>
    %79 = tpu.matmul %78, %1, %cst_15 {dimension_numbers = #tpu.dot_dimension_numbers<[1], [0], [0], [1], [0, 0, 1, 1], [], []>} : vector<2x64xf32>, vector<64x256xf32>, vector<2x256xf32> -> vector<2x256xf32>
    %80 = arith.addf %15, %79 : vector<2x256xf32>
    %81 = vector.extract_strided_slice %80 {offsets = [0, 0], sizes = [2, 128], strides = [1, 1]} : vector<2x256xf32> to vector<2x128xf32>
    %82 = arith.negf %81 : vector<2x128xf32>
    %83 = math.exp %82 : vector<2x128xf32>
    %cst_16 = arith.constant 1.000000e+00 : f32
    %84 = vector.broadcast %cst_16 : f32 to vector<2x128xf32>
    %85 = arith.addf %84, %83 : vector<2x128xf32>
    %86 = arith.divf %84, %85 : vector<2x128xf32>
    %87 = vector.extract_strided_slice %86 {offsets = [0, 0], sizes = [2, 64], strides = [1, 1]} : vector<2x128xf32> to vector<2x64xf32>
    %88 = vector.extract_strided_slice %86 {offsets = [0, 64], sizes = [2, 64], strides = [1, 1]} : vector<2x128xf32> to vector<2x64xf32>
    %89 = vector.extract_strided_slice %80 {offsets = [0, 128], sizes = [2, 64], strides = [1, 1]} : vector<2x256xf32> to vector<2x64xf32>
    %90 = math.tanh %89 : vector<2x64xf32>
    %91 = vector.extract_strided_slice %80 {offsets = [0, 192], sizes = [2, 64], strides = [1, 1]} : vector<2x256xf32> to vector<2x64xf32>
    %92 = arith.negf %91 : vector<2x64xf32>
    %93 = math.exp %92 : vector<2x64xf32>
    %cst_17 = arith.constant 1.000000e+00 : f32
    %94 = vector.broadcast %cst_17 : f32 to vector<2x64xf32>
    %95 = arith.addf %94, %93 : vector<2x64xf32>
    %96 = arith.divf %94, %95 : vector<2x64xf32>
    %97 = arith.mulf %88, %76 : vector<2x64xf32>
    %98 = arith.mulf %87, %90 : vector<2x64xf32>
    %99 = arith.addf %97, %98 : vector<2x64xf32>
    %100 = math.tanh %99 : vector<2x64xf32>
    %101 = arith.mulf %96, %100 : vector<2x64xf32>
    %cst_18 = arith.constant dense<0.000000e+00> : vector<2x256xf32>
    %102 = tpu.matmul %101, %1, %cst_18 {dimension_numbers = #tpu.dot_dimension_numbers<[1], [0], [0], [1], [0, 0, 1, 1], [], []>} : vector<2x64xf32>, vector<64x256xf32>, vector<2x256xf32> -> vector<2x256xf32>
    %103 = arith.addf %18, %102 : vector<2x256xf32>
    %104 = vector.extract_strided_slice %103 {offsets = [0, 0], sizes = [2, 128], strides = [1, 1]} : vector<2x256xf32> to vector<2x128xf32>
    %105 = arith.negf %104 : vector<2x128xf32>
    %106 = math.exp %105 : vector<2x128xf32>
    %cst_19 = arith.constant 1.000000e+00 : f32
    %107 = vector.broadcast %cst_19 : f32 to vector<2x128xf32>
    %108 = arith.addf %107, %106 : vector<2x128xf32>
    %109 = arith.divf %107, %108 : vector<2x128xf32>
    %110 = vector.extract_strided_slice %109 {offsets = [0, 0], sizes = [2, 64], strides = [1, 1]} : vector<2x128xf32> to vector<2x64xf32>
    %111 = vector.extract_strided_slice %109 {offsets = [0, 64], sizes = [2, 64], strides = [1, 1]} : vector<2x128xf32> to vector<2x64xf32>
    %112 = vector.extract_strided_slice %103 {offsets = [0, 128], sizes = [2, 64], strides = [1, 1]} : vector<2x256xf32> to vector<2x64xf32>
    %113 = math.tanh %112 : vector<2x64xf32>
    %114 = vector.extract_strided_slice %103 {offsets = [0, 192], sizes = [2, 64], strides = [1, 1]} : vector<2x256xf32> to vector<2x64xf32>
    %115 = arith.negf %114 : vector<2x64xf32>
    %116 = math.exp %115 : vector<2x64xf32>
    %cst_20 = arith.constant 1.000000e+00 : f32
    %117 = vector.broadcast %cst_20 : f32 to vector<2x64xf32>
    %118 = arith.addf %117, %116 : vector<2x64xf32>
    %119 = arith.divf %117, %118 : vector<2x64xf32>
    %120 = arith.mulf %111, %99 : vector<2x64xf32>
    %121 = arith.mulf %110, %113 : vector<2x64xf32>
    %122 = arith.addf %120, %121 : vector<2x64xf32>
    %123 = math.tanh %122 : vector<2x64xf32>
    %124 = arith.mulf %119, %123 : vector<2x64xf32>
    %cst_21 = arith.constant dense<0.000000e+00> : vector<2x256xf32>
    %125 = tpu.matmul %124, %1, %cst_21 {dimension_numbers = #tpu.dot_dimension_numbers<[1], [0], [0], [1], [0, 0, 1, 1], [], []>} : vector<2x64xf32>, vector<64x256xf32>, vector<2x256xf32> -> vector<2x256xf32>
    %126 = arith.addf %21, %125 : vector<2x256xf32>
    %127 = vector.extract_strided_slice %126 {offsets = [0, 0], sizes = [2, 128], strides = [1, 1]} : vector<2x256xf32> to vector<2x128xf32>
    %128 = arith.negf %127 : vector<2x128xf32>
    %129 = math.exp %128 : vector<2x128xf32>
    %cst_22 = arith.constant 1.000000e+00 : f32
    %130 = vector.broadcast %cst_22 : f32 to vector<2x128xf32>
    %131 = arith.addf %130, %129 : vector<2x128xf32>
    %132 = arith.divf %130, %131 : vector<2x128xf32>
    %133 = vector.extract_strided_slice %132 {offsets = [0, 0], sizes = [2, 64], strides = [1, 1]} : vector<2x128xf32> to vector<2x64xf32>
    %134 = vector.extract_strided_slice %132 {offsets = [0, 64], sizes = [2, 64], strides = [1, 1]} : vector<2x128xf32> to vector<2x64xf32>
    %135 = vector.extract_strided_slice %126 {offsets = [0, 128], sizes = [2, 64], strides = [1, 1]} : vector<2x256xf32> to vector<2x64xf32>
    %136 = math.tanh %135 : vector<2x64xf32>
    %137 = vector.extract_strided_slice %126 {offsets = [0, 192], sizes = [2, 64], strides = [1, 1]} : vector<2x256xf32> to vector<2x64xf32>
    %138 = arith.negf %137 : vector<2x64xf32>
    %139 = math.exp %138 : vector<2x64xf32>
    %cst_23 = arith.constant 1.000000e+00 : f32
    %140 = vector.broadcast %cst_23 : f32 to vector<2x64xf32>
    %141 = arith.addf %140, %139 : vector<2x64xf32>
    %142 = arith.divf %140, %141 : vector<2x64xf32>
    %143 = arith.mulf %134, %122 : vector<2x64xf32>
    %144 = arith.mulf %133, %136 : vector<2x64xf32>
    %145 = arith.addf %143, %144 : vector<2x64xf32>
    %146 = math.tanh %145 : vector<2x64xf32>
    %147 = arith.mulf %142, %146 : vector<2x64xf32>
    %cst_24 = arith.constant dense<0.000000e+00> : vector<2x256xf32>
    %148 = tpu.matmul %147, %1, %cst_24 {dimension_numbers = #tpu.dot_dimension_numbers<[1], [0], [0], [1], [0, 0, 1, 1], [], []>} : vector<2x64xf32>, vector<64x256xf32>, vector<2x256xf32> -> vector<2x256xf32>
    %149 = arith.addf %24, %148 : vector<2x256xf32>
    %150 = vector.extract_strided_slice %149 {offsets = [0, 0], sizes = [2, 128], strides = [1, 1]} : vector<2x256xf32> to vector<2x128xf32>
    %151 = arith.negf %150 : vector<2x128xf32>
    %152 = math.exp %151 : vector<2x128xf32>
    %cst_25 = arith.constant 1.000000e+00 : f32
    %153 = vector.broadcast %cst_25 : f32 to vector<2x128xf32>
    %154 = arith.addf %153, %152 : vector<2x128xf32>
    %155 = arith.divf %153, %154 : vector<2x128xf32>
    %156 = vector.extract_strided_slice %155 {offsets = [0, 0], sizes = [2, 64], strides = [1, 1]} : vector<2x128xf32> to vector<2x64xf32>
    %157 = vector.extract_strided_slice %155 {offsets = [0, 64], sizes = [2, 64], strides = [1, 1]} : vector<2x128xf32> to vector<2x64xf32>
    %158 = vector.extract_strided_slice %149 {offsets = [0, 128], sizes = [2, 64], strides = [1, 1]} : vector<2x256xf32> to vector<2x64xf32>
    %159 = math.tanh %158 : vector<2x64xf32>
    %160 = vector.extract_strided_slice %149 {offsets = [0, 192], sizes = [2, 64], strides = [1, 1]} : vector<2x256xf32> to vector<2x64xf32>
    %161 = arith.negf %160 : vector<2x64xf32>
    %162 = math.exp %161 : vector<2x64xf32>
    %cst_26 = arith.constant 1.000000e+00 : f32
    %163 = vector.broadcast %cst_26 : f32 to vector<2x64xf32>
    %164 = arith.addf %163, %162 : vector<2x64xf32>
    %165 = arith.divf %163, %164 : vector<2x64xf32>
    %166 = arith.mulf %157, %145 : vector<2x64xf32>
    %167 = arith.mulf %156, %159 : vector<2x64xf32>
    %168 = arith.addf %166, %167 : vector<2x64xf32>
    %169 = math.tanh %168 : vector<2x64xf32>
    %170 = arith.mulf %165, %169 : vector<2x64xf32>
    %cst_27 = arith.constant dense<0.000000e+00> : vector<2x256xf32>
    %171 = tpu.matmul %170, %1, %cst_27 {dimension_numbers = #tpu.dot_dimension_numbers<[1], [0], [0], [1], [0, 0, 1, 1], [], []>} : vector<2x64xf32>, vector<64x256xf32>, vector<2x256xf32> -> vector<2x256xf32>
    %172 = arith.addf %27, %171 : vector<2x256xf32>
    %173 = vector.extract_strided_slice %172 {offsets = [0, 0], sizes = [2, 128], strides = [1, 1]} : vector<2x256xf32> to vector<2x128xf32>
    %174 = arith.negf %173 : vector<2x128xf32>
    %175 = math.exp %174 : vector<2x128xf32>
    %cst_28 = arith.constant 1.000000e+00 : f32
    %176 = vector.broadcast %cst_28 : f32 to vector<2x128xf32>
    %177 = arith.addf %176, %175 : vector<2x128xf32>
    %178 = arith.divf %176, %177 : vector<2x128xf32>
    %179 = vector.extract_strided_slice %178 {offsets = [0, 0], sizes = [2, 64], strides = [1, 1]} : vector<2x128xf32> to vector<2x64xf32>
    %180 = vector.extract_strided_slice %178 {offsets = [0, 64], sizes = [2, 64], strides = [1, 1]} : vector<2x128xf32> to vector<2x64xf32>
    %181 = vector.extract_strided_slice %172 {offsets = [0, 128], sizes = [2, 64], strides = [1, 1]} : vector<2x256xf32> to vector<2x64xf32>
    %182 = math.tanh %181 : vector<2x64xf32>
    %183 = vector.extract_strided_slice %172 {offsets = [0, 192], sizes = [2, 64], strides = [1, 1]} : vector<2x256xf32> to vector<2x64xf32>
    %184 = arith.negf %183 : vector<2x64xf32>
    %185 = math.exp %184 : vector<2x64xf32>
    %cst_29 = arith.constant 1.000000e+00 : f32
    %186 = vector.broadcast %cst_29 : f32 to vector<2x64xf32>
    %187 = arith.addf %186, %185 : vector<2x64xf32>
    %188 = arith.divf %186, %187 : vector<2x64xf32>
    %189 = arith.mulf %180, %168 : vector<2x64xf32>
    %190 = arith.mulf %179, %182 : vector<2x64xf32>
    %191 = arith.addf %189, %190 : vector<2x64xf32>
    %192 = math.tanh %191 : vector<2x64xf32>
    %193 = arith.mulf %188, %192 : vector<2x64xf32>
    %cst_30 = arith.constant dense<0.000000e+00> : vector<2x256xf32>
    %194 = tpu.matmul %193, %1, %cst_30 {dimension_numbers = #tpu.dot_dimension_numbers<[1], [0], [0], [1], [0, 0, 1, 1], [], []>} : vector<2x64xf32>, vector<64x256xf32>, vector<2x256xf32> -> vector<2x256xf32>
    %195 = arith.addf %30, %194 : vector<2x256xf32>
    %196 = vector.extract_strided_slice %195 {offsets = [0, 0], sizes = [2, 128], strides = [1, 1]} : vector<2x256xf32> to vector<2x128xf32>
    %197 = arith.negf %196 : vector<2x128xf32>
    %198 = math.exp %197 : vector<2x128xf32>
    %cst_31 = arith.constant 1.000000e+00 : f32
    %199 = vector.broadcast %cst_31 : f32 to vector<2x128xf32>
    %200 = arith.addf %199, %198 : vector<2x128xf32>
    %201 = arith.divf %199, %200 : vector<2x128xf32>
    %202 = vector.extract_strided_slice %201 {offsets = [0, 0], sizes = [2, 64], strides = [1, 1]} : vector<2x128xf32> to vector<2x64xf32>
    %203 = vector.extract_strided_slice %201 {offsets = [0, 64], sizes = [2, 64], strides = [1, 1]} : vector<2x128xf32> to vector<2x64xf32>
    %204 = vector.extract_strided_slice %195 {offsets = [0, 128], sizes = [2, 64], strides = [1, 1]} : vector<2x256xf32> to vector<2x64xf32>
    %205 = math.tanh %204 : vector<2x64xf32>
    %206 = vector.extract_strided_slice %195 {offsets = [0, 192], sizes = [2, 64], strides = [1, 1]} : vector<2x256xf32> to vector<2x64xf32>
    %207 = arith.negf %206 : vector<2x64xf32>
    %208 = math.exp %207 : vector<2x64xf32>
    %cst_32 = arith.constant 1.000000e+00 : f32
    %209 = vector.broadcast %cst_32 : f32 to vector<2x64xf32>
    %210 = arith.addf %209, %208 : vector<2x64xf32>
    %211 = arith.divf %209, %210 : vector<2x64xf32>
    %212 = arith.mulf %203, %191 : vector<2x64xf32>
    %213 = arith.mulf %202, %205 : vector<2x64xf32>
    %214 = arith.addf %212, %213 : vector<2x64xf32>
    %215 = math.tanh %214 : vector<2x64xf32>
    %216 = arith.mulf %211, %215 : vector<2x64xf32>
    %217 = vector.extract_strided_slice %55 {offsets = [0, 0], sizes = [1, 32], strides = [1, 1]} : vector<2x64xf32> to vector<1x32xf32>
    %218 = vector.extract_strided_slice %78 {offsets = [0, 0], sizes = [1, 32], strides = [1, 1]} : vector<2x64xf32> to vector<1x32xf32>
    %219 = vector.extract_strided_slice %101 {offsets = [0, 0], sizes = [1, 32], strides = [1, 1]} : vector<2x64xf32> to vector<1x32xf32>
    %220 = vector.extract_strided_slice %124 {offsets = [0, 0], sizes = [1, 32], strides = [1, 1]} : vector<2x64xf32> to vector<1x32xf32>
    %221 = vector.extract_strided_slice %147 {offsets = [0, 0], sizes = [1, 32], strides = [1, 1]} : vector<2x64xf32> to vector<1x32xf32>
    %222 = vector.extract_strided_slice %170 {offsets = [0, 0], sizes = [1, 32], strides = [1, 1]} : vector<2x64xf32> to vector<1x32xf32>
    %223 = vector.extract_strided_slice %193 {offsets = [0, 0], sizes = [1, 32], strides = [1, 1]} : vector<2x64xf32> to vector<1x32xf32>
    %224 = vector.extract_strided_slice %216 {offsets = [0, 0], sizes = [1, 32], strides = [1, 1]} : vector<2x64xf32> to vector<1x32xf32>
    %225 = tpu.concatenate %217, %218, %219, %220, %221, %222, %223, %224 in 0 : vector<1x32xf32>, vector<1x32xf32>, vector<1x32xf32>, vector<1x32xf32>, vector<1x32xf32>, vector<1x32xf32>, vector<1x32xf32>, vector<1x32xf32> -> vector<8x32xf32>
    %226 = vector.extract_strided_slice %216 {offsets = [1, 32], sizes = [1, 32], strides = [1, 1]} : vector<2x64xf32> to vector<1x32xf32>
    %227 = vector.extract_strided_slice %193 {offsets = [1, 32], sizes = [1, 32], strides = [1, 1]} : vector<2x64xf32> to vector<1x32xf32>
    %228 = vector.extract_strided_slice %170 {offsets = [1, 32], sizes = [1, 32], strides = [1, 1]} : vector<2x64xf32> to vector<1x32xf32>
    %229 = vector.extract_strided_slice %147 {offsets = [1, 32], sizes = [1, 32], strides = [1, 1]} : vector<2x64xf32> to vector<1x32xf32>
    %230 = vector.extract_strided_slice %124 {offsets = [1, 32], sizes = [1, 32], strides = [1, 1]} : vector<2x64xf32> to vector<1x32xf32>
    %231 = vector.extract_strided_slice %101 {offsets = [1, 32], sizes = [1, 32], strides = [1, 1]} : vector<2x64xf32> to vector<1x32xf32>
    %232 = vector.extract_strided_slice %78 {offsets = [1, 32], sizes = [1, 32], strides = [1, 1]} : vector<2x64xf32> to vector<1x32xf32>
    %233 = vector.extract_strided_slice %55 {offsets = [1, 32], sizes = [1, 32], strides = [1, 1]} : vector<2x64xf32> to vector<1x32xf32>
    %234 = tpu.concatenate %226, %227, %228, %229, %230, %231, %232, %233 in 0 : vector<1x32xf32>, vector<1x32xf32>, vector<1x32xf32>, vector<1x32xf32>, vector<1x32xf32>, vector<1x32xf32>, vector<1x32xf32>, vector<1x32xf32> -> vector<8x32xf32>
    %235 = tpu.concatenate %225, %234 in 1 : vector<8x32xf32>, vector<8x32xf32> -> vector<8x64xf32>
    %c0_33 = arith.constant 0 : index
    %c0_34 = arith.constant 0 : index
    %236 = vector.load %arg5[%c0_33, %c0_34] : memref<64x256xf32, #tpu.memory_space<vmem>>, vector<64x256xf32>
    %c0_35 = arith.constant 0 : index
    %c0_36 = arith.constant 0 : index
    %237 = vector.load %arg4[%c0_35, %c0_36] : memref<64x256xf32, #tpu.memory_space<vmem>>, vector<64x256xf32>
    %cst_37 = arith.constant dense<0.000000e+00> : vector<8x256xf32>
    %238 = tpu.matmul %235, %237, %cst_37 {dimension_numbers = #tpu.dot_dimension_numbers<[1], [0], [0], [1], [0, 0, 1, 1], [], []>} : vector<8x64xf32>, vector<64x256xf32>, vector<8x256xf32> -> vector<8x256xf32>
    %c0_38 = arith.constant 0 : index
    %c0_39 = arith.constant 0 : index
    %239 = vector.load %arg6[%c0_38, %c0_39] : memref<1x256xf32, #tpu.memory_space<vmem>>, vector<1x256xf32>
    %240 = vector.broadcast %239 : vector<1x256xf32> to vector<8x256xf32>
    %241 = arith.addf %238, %240 : vector<8x256xf32>
    %242 = vector.extract_strided_slice %241 {offsets = [0, 0], sizes = [1, 256], strides = [1, 1]} : vector<8x256xf32> to vector<1x256xf32>
    %243 = vector.extract_strided_slice %241 {offsets = [7, 0], sizes = [1, 256], strides = [1, 1]} : vector<8x256xf32> to vector<1x256xf32>
    %244 = tpu.concatenate %242, %243 in 0 : vector<1x256xf32>, vector<1x256xf32> -> vector<2x256xf32>
    %245 = vector.extract_strided_slice %241 {offsets = [1, 0], sizes = [1, 256], strides = [1, 1]} : vector<8x256xf32> to vector<1x256xf32>
    %246 = vector.extract_strided_slice %241 {offsets = [6, 0], sizes = [1, 256], strides = [1, 1]} : vector<8x256xf32> to vector<1x256xf32>
    %247 = tpu.concatenate %245, %246 in 0 : vector<1x256xf32>, vector<1x256xf32> -> vector<2x256xf32>
    %248 = vector.extract_strided_slice %241 {offsets = [2, 0], sizes = [1, 256], strides = [1, 1]} : vector<8x256xf32> to vector<1x256xf32>
    %249 = vector.extract_strided_slice %241 {offsets = [5, 0], sizes = [1, 256], strides = [1, 1]} : vector<8x256xf32> to vector<1x256xf32>
    %250 = tpu.concatenate %248, %249 in 0 : vector<1x256xf32>, vector<1x256xf32> -> vector<2x256xf32>
    %251 = vector.extract_strided_slice %241 {offsets = [3, 0], sizes = [1, 256], strides = [1, 1]} : vector<8x256xf32> to vector<1x256xf32>
    %252 = vector.extract_strided_slice %241 {offsets = [4, 0], sizes = [1, 256], strides = [1, 1]} : vector<8x256xf32> to vector<1x256xf32>
    %253 = tpu.concatenate %251, %252 in 0 : vector<1x256xf32>, vector<1x256xf32> -> vector<2x256xf32>
    %254 = vector.extract_strided_slice %241 {offsets = [4, 0], sizes = [1, 256], strides = [1, 1]} : vector<8x256xf32> to vector<1x256xf32>
    %255 = vector.extract_strided_slice %241 {offsets = [3, 0], sizes = [1, 256], strides = [1, 1]} : vector<8x256xf32> to vector<1x256xf32>
    %256 = tpu.concatenate %254, %255 in 0 : vector<1x256xf32>, vector<1x256xf32> -> vector<2x256xf32>
    %257 = vector.extract_strided_slice %241 {offsets = [5, 0], sizes = [1, 256], strides = [1, 1]} : vector<8x256xf32> to vector<1x256xf32>
    %258 = vector.extract_strided_slice %241 {offsets = [2, 0], sizes = [1, 256], strides = [1, 1]} : vector<8x256xf32> to vector<1x256xf32>
    %259 = tpu.concatenate %257, %258 in 0 : vector<1x256xf32>, vector<1x256xf32> -> vector<2x256xf32>
    %260 = vector.extract_strided_slice %241 {offsets = [6, 0], sizes = [1, 256], strides = [1, 1]} : vector<8x256xf32> to vector<1x256xf32>
    %261 = vector.extract_strided_slice %241 {offsets = [1, 0], sizes = [1, 256], strides = [1, 1]} : vector<8x256xf32> to vector<1x256xf32>
    %262 = tpu.concatenate %260, %261 in 0 : vector<1x256xf32>, vector<1x256xf32> -> vector<2x256xf32>
    %263 = vector.extract_strided_slice %241 {offsets = [7, 0], sizes = [1, 256], strides = [1, 1]} : vector<8x256xf32> to vector<1x256xf32>
    %264 = vector.extract_strided_slice %241 {offsets = [0, 0], sizes = [1, 256], strides = [1, 1]} : vector<8x256xf32> to vector<1x256xf32>
    %265 = tpu.concatenate %263, %264 in 0 : vector<1x256xf32>, vector<1x256xf32> -> vector<2x256xf32>
    %cst_40 = arith.constant 0.000000e+00 : f32
    %266 = vector.broadcast %cst_40 : f32 to vector<2x64xf32>
    %cst_41 = arith.constant 0.000000e+00 : f32
    %267 = vector.broadcast %cst_41 : f32 to vector<2x64xf32>
    %cst_42 = arith.constant dense<0.000000e+00> : vector<2x256xf32>
    %268 = tpu.matmul %266, %236, %cst_42 {dimension_numbers = #tpu.dot_dimension_numbers<[1], [0], [0], [1], [0, 0, 1, 1], [], []>} : vector<2x64xf32>, vector<64x256xf32>, vector<2x256xf32> -> vector<2x256xf32>
    %269 = arith.addf %244, %268 : vector<2x256xf32>
    %270 = vector.extract_strided_slice %269 {offsets = [0, 0], sizes = [2, 128], strides = [1, 1]} : vector<2x256xf32> to vector<2x128xf32>
    %271 = arith.negf %270 : vector<2x128xf32>
    %272 = math.exp %271 : vector<2x128xf32>
    %cst_43 = arith.constant 1.000000e+00 : f32
    %273 = vector.broadcast %cst_43 : f32 to vector<2x128xf32>
    %274 = arith.addf %273, %272 : vector<2x128xf32>
    %275 = arith.divf %273, %274 : vector<2x128xf32>
    %276 = vector.extract_strided_slice %275 {offsets = [0, 0], sizes = [2, 64], strides = [1, 1]} : vector<2x128xf32> to vector<2x64xf32>
    %277 = vector.extract_strided_slice %275 {offsets = [0, 64], sizes = [2, 64], strides = [1, 1]} : vector<2x128xf32> to vector<2x64xf32>
    %278 = vector.extract_strided_slice %269 {offsets = [0, 128], sizes = [2, 64], strides = [1, 1]} : vector<2x256xf32> to vector<2x64xf32>
    %279 = math.tanh %278 : vector<2x64xf32>
    %280 = vector.extract_strided_slice %269 {offsets = [0, 192], sizes = [2, 64], strides = [1, 1]} : vector<2x256xf32> to vector<2x64xf32>
    %281 = arith.negf %280 : vector<2x64xf32>
    %282 = math.exp %281 : vector<2x64xf32>
    %cst_44 = arith.constant 1.000000e+00 : f32
    %283 = vector.broadcast %cst_44 : f32 to vector<2x64xf32>
    %284 = arith.addf %283, %282 : vector<2x64xf32>
    %285 = arith.divf %283, %284 : vector<2x64xf32>
    %286 = arith.mulf %277, %267 : vector<2x64xf32>
    %287 = arith.mulf %276, %279 : vector<2x64xf32>
    %288 = arith.addf %286, %287 : vector<2x64xf32>
    %289 = math.tanh %288 : vector<2x64xf32>
    %290 = arith.mulf %285, %289 : vector<2x64xf32>
    %cst_45 = arith.constant dense<0.000000e+00> : vector<2x256xf32>
    %291 = tpu.matmul %290, %236, %cst_45 {dimension_numbers = #tpu.dot_dimension_numbers<[1], [0], [0], [1], [0, 0, 1, 1], [], []>} : vector<2x64xf32>, vector<64x256xf32>, vector<2x256xf32> -> vector<2x256xf32>
    %292 = arith.addf %247, %291 : vector<2x256xf32>
    %293 = vector.extract_strided_slice %292 {offsets = [0, 0], sizes = [2, 128], strides = [1, 1]} : vector<2x256xf32> to vector<2x128xf32>
    %294 = arith.negf %293 : vector<2x128xf32>
    %295 = math.exp %294 : vector<2x128xf32>
    %cst_46 = arith.constant 1.000000e+00 : f32
    %296 = vector.broadcast %cst_46 : f32 to vector<2x128xf32>
    %297 = arith.addf %296, %295 : vector<2x128xf32>
    %298 = arith.divf %296, %297 : vector<2x128xf32>
    %299 = vector.extract_strided_slice %298 {offsets = [0, 0], sizes = [2, 64], strides = [1, 1]} : vector<2x128xf32> to vector<2x64xf32>
    %300 = vector.extract_strided_slice %298 {offsets = [0, 64], sizes = [2, 64], strides = [1, 1]} : vector<2x128xf32> to vector<2x64xf32>
    %301 = vector.extract_strided_slice %292 {offsets = [0, 128], sizes = [2, 64], strides = [1, 1]} : vector<2x256xf32> to vector<2x64xf32>
    %302 = math.tanh %301 : vector<2x64xf32>
    %303 = vector.extract_strided_slice %292 {offsets = [0, 192], sizes = [2, 64], strides = [1, 1]} : vector<2x256xf32> to vector<2x64xf32>
    %304 = arith.negf %303 : vector<2x64xf32>
    %305 = math.exp %304 : vector<2x64xf32>
    %cst_47 = arith.constant 1.000000e+00 : f32
    %306 = vector.broadcast %cst_47 : f32 to vector<2x64xf32>
    %307 = arith.addf %306, %305 : vector<2x64xf32>
    %308 = arith.divf %306, %307 : vector<2x64xf32>
    %309 = arith.mulf %300, %288 : vector<2x64xf32>
    %310 = arith.mulf %299, %302 : vector<2x64xf32>
    %311 = arith.addf %309, %310 : vector<2x64xf32>
    %312 = math.tanh %311 : vector<2x64xf32>
    %313 = arith.mulf %308, %312 : vector<2x64xf32>
    %cst_48 = arith.constant dense<0.000000e+00> : vector<2x256xf32>
    %314 = tpu.matmul %313, %236, %cst_48 {dimension_numbers = #tpu.dot_dimension_numbers<[1], [0], [0], [1], [0, 0, 1, 1], [], []>} : vector<2x64xf32>, vector<64x256xf32>, vector<2x256xf32> -> vector<2x256xf32>
    %315 = arith.addf %250, %314 : vector<2x256xf32>
    %316 = vector.extract_strided_slice %315 {offsets = [0, 0], sizes = [2, 128], strides = [1, 1]} : vector<2x256xf32> to vector<2x128xf32>
    %317 = arith.negf %316 : vector<2x128xf32>
    %318 = math.exp %317 : vector<2x128xf32>
    %cst_49 = arith.constant 1.000000e+00 : f32
    %319 = vector.broadcast %cst_49 : f32 to vector<2x128xf32>
    %320 = arith.addf %319, %318 : vector<2x128xf32>
    %321 = arith.divf %319, %320 : vector<2x128xf32>
    %322 = vector.extract_strided_slice %321 {offsets = [0, 0], sizes = [2, 64], strides = [1, 1]} : vector<2x128xf32> to vector<2x64xf32>
    %323 = vector.extract_strided_slice %321 {offsets = [0, 64], sizes = [2, 64], strides = [1, 1]} : vector<2x128xf32> to vector<2x64xf32>
    %324 = vector.extract_strided_slice %315 {offsets = [0, 128], sizes = [2, 64], strides = [1, 1]} : vector<2x256xf32> to vector<2x64xf32>
    %325 = math.tanh %324 : vector<2x64xf32>
    %326 = vector.extract_strided_slice %315 {offsets = [0, 192], sizes = [2, 64], strides = [1, 1]} : vector<2x256xf32> to vector<2x64xf32>
    %327 = arith.negf %326 : vector<2x64xf32>
    %328 = math.exp %327 : vector<2x64xf32>
    %cst_50 = arith.constant 1.000000e+00 : f32
    %329 = vector.broadcast %cst_50 : f32 to vector<2x64xf32>
    %330 = arith.addf %329, %328 : vector<2x64xf32>
    %331 = arith.divf %329, %330 : vector<2x64xf32>
    %332 = arith.mulf %323, %311 : vector<2x64xf32>
    %333 = arith.mulf %322, %325 : vector<2x64xf32>
    %334 = arith.addf %332, %333 : vector<2x64xf32>
    %335 = math.tanh %334 : vector<2x64xf32>
    %336 = arith.mulf %331, %335 : vector<2x64xf32>
    %cst_51 = arith.constant dense<0.000000e+00> : vector<2x256xf32>
    %337 = tpu.matmul %336, %236, %cst_51 {dimension_numbers = #tpu.dot_dimension_numbers<[1], [0], [0], [1], [0, 0, 1, 1], [], []>} : vector<2x64xf32>, vector<64x256xf32>, vector<2x256xf32> -> vector<2x256xf32>
    %338 = arith.addf %253, %337 : vector<2x256xf32>
    %339 = vector.extract_strided_slice %338 {offsets = [0, 0], sizes = [2, 128], strides = [1, 1]} : vector<2x256xf32> to vector<2x128xf32>
    %340 = arith.negf %339 : vector<2x128xf32>
    %341 = math.exp %340 : vector<2x128xf32>
    %cst_52 = arith.constant 1.000000e+00 : f32
    %342 = vector.broadcast %cst_52 : f32 to vector<2x128xf32>
    %343 = arith.addf %342, %341 : vector<2x128xf32>
    %344 = arith.divf %342, %343 : vector<2x128xf32>
    %345 = vector.extract_strided_slice %344 {offsets = [0, 0], sizes = [2, 64], strides = [1, 1]} : vector<2x128xf32> to vector<2x64xf32>
    %346 = vector.extract_strided_slice %344 {offsets = [0, 64], sizes = [2, 64], strides = [1, 1]} : vector<2x128xf32> to vector<2x64xf32>
    %347 = vector.extract_strided_slice %338 {offsets = [0, 128], sizes = [2, 64], strides = [1, 1]} : vector<2x256xf32> to vector<2x64xf32>
    %348 = math.tanh %347 : vector<2x64xf32>
    %349 = vector.extract_strided_slice %338 {offsets = [0, 192], sizes = [2, 64], strides = [1, 1]} : vector<2x256xf32> to vector<2x64xf32>
    %350 = arith.negf %349 : vector<2x64xf32>
    %351 = math.exp %350 : vector<2x64xf32>
    %cst_53 = arith.constant 1.000000e+00 : f32
    %352 = vector.broadcast %cst_53 : f32 to vector<2x64xf32>
    %353 = arith.addf %352, %351 : vector<2x64xf32>
    %354 = arith.divf %352, %353 : vector<2x64xf32>
    %355 = arith.mulf %346, %334 : vector<2x64xf32>
    %356 = arith.mulf %345, %348 : vector<2x64xf32>
    %357 = arith.addf %355, %356 : vector<2x64xf32>
    %358 = math.tanh %357 : vector<2x64xf32>
    %359 = arith.mulf %354, %358 : vector<2x64xf32>
    %cst_54 = arith.constant dense<0.000000e+00> : vector<2x256xf32>
    %360 = tpu.matmul %359, %236, %cst_54 {dimension_numbers = #tpu.dot_dimension_numbers<[1], [0], [0], [1], [0, 0, 1, 1], [], []>} : vector<2x64xf32>, vector<64x256xf32>, vector<2x256xf32> -> vector<2x256xf32>
    %361 = arith.addf %256, %360 : vector<2x256xf32>
    %362 = vector.extract_strided_slice %361 {offsets = [0, 0], sizes = [2, 128], strides = [1, 1]} : vector<2x256xf32> to vector<2x128xf32>
    %363 = arith.negf %362 : vector<2x128xf32>
    %364 = math.exp %363 : vector<2x128xf32>
    %cst_55 = arith.constant 1.000000e+00 : f32
    %365 = vector.broadcast %cst_55 : f32 to vector<2x128xf32>
    %366 = arith.addf %365, %364 : vector<2x128xf32>
    %367 = arith.divf %365, %366 : vector<2x128xf32>
    %368 = vector.extract_strided_slice %367 {offsets = [0, 0], sizes = [2, 64], strides = [1, 1]} : vector<2x128xf32> to vector<2x64xf32>
    %369 = vector.extract_strided_slice %367 {offsets = [0, 64], sizes = [2, 64], strides = [1, 1]} : vector<2x128xf32> to vector<2x64xf32>
    %370 = vector.extract_strided_slice %361 {offsets = [0, 128], sizes = [2, 64], strides = [1, 1]} : vector<2x256xf32> to vector<2x64xf32>
    %371 = math.tanh %370 : vector<2x64xf32>
    %372 = vector.extract_strided_slice %361 {offsets = [0, 192], sizes = [2, 64], strides = [1, 1]} : vector<2x256xf32> to vector<2x64xf32>
    %373 = arith.negf %372 : vector<2x64xf32>
    %374 = math.exp %373 : vector<2x64xf32>
    %cst_56 = arith.constant 1.000000e+00 : f32
    %375 = vector.broadcast %cst_56 : f32 to vector<2x64xf32>
    %376 = arith.addf %375, %374 : vector<2x64xf32>
    %377 = arith.divf %375, %376 : vector<2x64xf32>
    %378 = arith.mulf %369, %357 : vector<2x64xf32>
    %379 = arith.mulf %368, %371 : vector<2x64xf32>
    %380 = arith.addf %378, %379 : vector<2x64xf32>
    %381 = math.tanh %380 : vector<2x64xf32>
    %382 = arith.mulf %377, %381 : vector<2x64xf32>
    %cst_57 = arith.constant dense<0.000000e+00> : vector<2x256xf32>
    %383 = tpu.matmul %382, %236, %cst_57 {dimension_numbers = #tpu.dot_dimension_numbers<[1], [0], [0], [1], [0, 0, 1, 1], [], []>} : vector<2x64xf32>, vector<64x256xf32>, vector<2x256xf32> -> vector<2x256xf32>
    %384 = arith.addf %259, %383 : vector<2x256xf32>
    %385 = vector.extract_strided_slice %384 {offsets = [0, 0], sizes = [2, 128], strides = [1, 1]} : vector<2x256xf32> to vector<2x128xf32>
    %386 = arith.negf %385 : vector<2x128xf32>
    %387 = math.exp %386 : vector<2x128xf32>
    %cst_58 = arith.constant 1.000000e+00 : f32
    %388 = vector.broadcast %cst_58 : f32 to vector<2x128xf32>
    %389 = arith.addf %388, %387 : vector<2x128xf32>
    %390 = arith.divf %388, %389 : vector<2x128xf32>
    %391 = vector.extract_strided_slice %390 {offsets = [0, 0], sizes = [2, 64], strides = [1, 1]} : vector<2x128xf32> to vector<2x64xf32>
    %392 = vector.extract_strided_slice %390 {offsets = [0, 64], sizes = [2, 64], strides = [1, 1]} : vector<2x128xf32> to vector<2x64xf32>
    %393 = vector.extract_strided_slice %384 {offsets = [0, 128], sizes = [2, 64], strides = [1, 1]} : vector<2x256xf32> to vector<2x64xf32>
    %394 = math.tanh %393 : vector<2x64xf32>
    %395 = vector.extract_strided_slice %384 {offsets = [0, 192], sizes = [2, 64], strides = [1, 1]} : vector<2x256xf32> to vector<2x64xf32>
    %396 = arith.negf %395 : vector<2x64xf32>
    %397 = math.exp %396 : vector<2x64xf32>
    %cst_59 = arith.constant 1.000000e+00 : f32
    %398 = vector.broadcast %cst_59 : f32 to vector<2x64xf32>
    %399 = arith.addf %398, %397 : vector<2x64xf32>
    %400 = arith.divf %398, %399 : vector<2x64xf32>
    %401 = arith.mulf %392, %380 : vector<2x64xf32>
    %402 = arith.mulf %391, %394 : vector<2x64xf32>
    %403 = arith.addf %401, %402 : vector<2x64xf32>
    %404 = math.tanh %403 : vector<2x64xf32>
    %405 = arith.mulf %400, %404 : vector<2x64xf32>
    %cst_60 = arith.constant dense<0.000000e+00> : vector<2x256xf32>
    %406 = tpu.matmul %405, %236, %cst_60 {dimension_numbers = #tpu.dot_dimension_numbers<[1], [0], [0], [1], [0, 0, 1, 1], [], []>} : vector<2x64xf32>, vector<64x256xf32>, vector<2x256xf32> -> vector<2x256xf32>
    %407 = arith.addf %262, %406 : vector<2x256xf32>
    %408 = vector.extract_strided_slice %407 {offsets = [0, 0], sizes = [2, 128], strides = [1, 1]} : vector<2x256xf32> to vector<2x128xf32>
    %409 = arith.negf %408 : vector<2x128xf32>
    %410 = math.exp %409 : vector<2x128xf32>
    %cst_61 = arith.constant 1.000000e+00 : f32
    %411 = vector.broadcast %cst_61 : f32 to vector<2x128xf32>
    %412 = arith.addf %411, %410 : vector<2x128xf32>
    %413 = arith.divf %411, %412 : vector<2x128xf32>
    %414 = vector.extract_strided_slice %413 {offsets = [0, 0], sizes = [2, 64], strides = [1, 1]} : vector<2x128xf32> to vector<2x64xf32>
    %415 = vector.extract_strided_slice %413 {offsets = [0, 64], sizes = [2, 64], strides = [1, 1]} : vector<2x128xf32> to vector<2x64xf32>
    %416 = vector.extract_strided_slice %407 {offsets = [0, 128], sizes = [2, 64], strides = [1, 1]} : vector<2x256xf32> to vector<2x64xf32>
    %417 = math.tanh %416 : vector<2x64xf32>
    %418 = vector.extract_strided_slice %407 {offsets = [0, 192], sizes = [2, 64], strides = [1, 1]} : vector<2x256xf32> to vector<2x64xf32>
    %419 = arith.negf %418 : vector<2x64xf32>
    %420 = math.exp %419 : vector<2x64xf32>
    %cst_62 = arith.constant 1.000000e+00 : f32
    %421 = vector.broadcast %cst_62 : f32 to vector<2x64xf32>
    %422 = arith.addf %421, %420 : vector<2x64xf32>
    %423 = arith.divf %421, %422 : vector<2x64xf32>
    %424 = arith.mulf %415, %403 : vector<2x64xf32>
    %425 = arith.mulf %414, %417 : vector<2x64xf32>
    %426 = arith.addf %424, %425 : vector<2x64xf32>
    %427 = math.tanh %426 : vector<2x64xf32>
    %428 = arith.mulf %423, %427 : vector<2x64xf32>
    %cst_63 = arith.constant dense<0.000000e+00> : vector<2x256xf32>
    %429 = tpu.matmul %428, %236, %cst_63 {dimension_numbers = #tpu.dot_dimension_numbers<[1], [0], [0], [1], [0, 0, 1, 1], [], []>} : vector<2x64xf32>, vector<64x256xf32>, vector<2x256xf32> -> vector<2x256xf32>
    %430 = arith.addf %265, %429 : vector<2x256xf32>
    %431 = vector.extract_strided_slice %430 {offsets = [0, 0], sizes = [2, 128], strides = [1, 1]} : vector<2x256xf32> to vector<2x128xf32>
    %432 = arith.negf %431 : vector<2x128xf32>
    %433 = math.exp %432 : vector<2x128xf32>
    %cst_64 = arith.constant 1.000000e+00 : f32
    %434 = vector.broadcast %cst_64 : f32 to vector<2x128xf32>
    %435 = arith.addf %434, %433 : vector<2x128xf32>
    %436 = arith.divf %434, %435 : vector<2x128xf32>
    %437 = vector.extract_strided_slice %436 {offsets = [0, 0], sizes = [2, 64], strides = [1, 1]} : vector<2x128xf32> to vector<2x64xf32>
    %438 = vector.extract_strided_slice %436 {offsets = [0, 64], sizes = [2, 64], strides = [1, 1]} : vector<2x128xf32> to vector<2x64xf32>
    %439 = vector.extract_strided_slice %430 {offsets = [0, 128], sizes = [2, 64], strides = [1, 1]} : vector<2x256xf32> to vector<2x64xf32>
    %440 = math.tanh %439 : vector<2x64xf32>
    %441 = vector.extract_strided_slice %430 {offsets = [0, 192], sizes = [2, 64], strides = [1, 1]} : vector<2x256xf32> to vector<2x64xf32>
    %442 = arith.negf %441 : vector<2x64xf32>
    %443 = math.exp %442 : vector<2x64xf32>
    %cst_65 = arith.constant 1.000000e+00 : f32
    %444 = vector.broadcast %cst_65 : f32 to vector<2x64xf32>
    %445 = arith.addf %444, %443 : vector<2x64xf32>
    %446 = arith.divf %444, %445 : vector<2x64xf32>
    %447 = arith.mulf %438, %426 : vector<2x64xf32>
    %448 = arith.mulf %437, %440 : vector<2x64xf32>
    %449 = arith.addf %447, %448 : vector<2x64xf32>
    %450 = math.tanh %449 : vector<2x64xf32>
    %451 = arith.mulf %446, %450 : vector<2x64xf32>
    %452 = vector.extract_strided_slice %290 {offsets = [0, 0], sizes = [1, 32], strides = [1, 1]} : vector<2x64xf32> to vector<1x32xf32>
    %453 = vector.extract_strided_slice %313 {offsets = [0, 0], sizes = [1, 32], strides = [1, 1]} : vector<2x64xf32> to vector<1x32xf32>
    %454 = vector.extract_strided_slice %336 {offsets = [0, 0], sizes = [1, 32], strides = [1, 1]} : vector<2x64xf32> to vector<1x32xf32>
    %455 = vector.extract_strided_slice %359 {offsets = [0, 0], sizes = [1, 32], strides = [1, 1]} : vector<2x64xf32> to vector<1x32xf32>
    %456 = vector.extract_strided_slice %382 {offsets = [0, 0], sizes = [1, 32], strides = [1, 1]} : vector<2x64xf32> to vector<1x32xf32>
    %457 = vector.extract_strided_slice %405 {offsets = [0, 0], sizes = [1, 32], strides = [1, 1]} : vector<2x64xf32> to vector<1x32xf32>
    %458 = vector.extract_strided_slice %428 {offsets = [0, 0], sizes = [1, 32], strides = [1, 1]} : vector<2x64xf32> to vector<1x32xf32>
    %459 = vector.extract_strided_slice %451 {offsets = [0, 0], sizes = [1, 32], strides = [1, 1]} : vector<2x64xf32> to vector<1x32xf32>
    %460 = tpu.concatenate %452, %453, %454, %455, %456, %457, %458, %459 in 0 : vector<1x32xf32>, vector<1x32xf32>, vector<1x32xf32>, vector<1x32xf32>, vector<1x32xf32>, vector<1x32xf32>, vector<1x32xf32>, vector<1x32xf32> -> vector<8x32xf32>
    %461 = vector.extract_strided_slice %451 {offsets = [1, 32], sizes = [1, 32], strides = [1, 1]} : vector<2x64xf32> to vector<1x32xf32>
    %462 = vector.extract_strided_slice %428 {offsets = [1, 32], sizes = [1, 32], strides = [1, 1]} : vector<2x64xf32> to vector<1x32xf32>
    %463 = vector.extract_strided_slice %405 {offsets = [1, 32], sizes = [1, 32], strides = [1, 1]} : vector<2x64xf32> to vector<1x32xf32>
    %464 = vector.extract_strided_slice %382 {offsets = [1, 32], sizes = [1, 32], strides = [1, 1]} : vector<2x64xf32> to vector<1x32xf32>
    %465 = vector.extract_strided_slice %359 {offsets = [1, 32], sizes = [1, 32], strides = [1, 1]} : vector<2x64xf32> to vector<1x32xf32>
    %466 = vector.extract_strided_slice %336 {offsets = [1, 32], sizes = [1, 32], strides = [1, 1]} : vector<2x64xf32> to vector<1x32xf32>
    %467 = vector.extract_strided_slice %313 {offsets = [1, 32], sizes = [1, 32], strides = [1, 1]} : vector<2x64xf32> to vector<1x32xf32>
    %468 = vector.extract_strided_slice %290 {offsets = [1, 32], sizes = [1, 32], strides = [1, 1]} : vector<2x64xf32> to vector<1x32xf32>
    %469 = tpu.concatenate %461, %462, %463, %464, %465, %466, %467, %468 in 0 : vector<1x32xf32>, vector<1x32xf32>, vector<1x32xf32>, vector<1x32xf32>, vector<1x32xf32>, vector<1x32xf32>, vector<1x32xf32>, vector<1x32xf32> -> vector<8x32xf32>
    %470 = tpu.concatenate %460, %469 in 1 : vector<8x32xf32>, vector<8x32xf32> -> vector<8x64xf32>
    %c0_66 = arith.constant 0 : index
    %c0_67 = arith.constant 0 : index
    %471 = vector.load %arg7[%c0_66, %c0_67] : memref<64x16xf32, #tpu.memory_space<vmem>>, vector<64x16xf32>
    %cst_68 = arith.constant dense<0.000000e+00> : vector<8x16xf32>
    %472 = tpu.matmul %470, %471, %cst_68 {dimension_numbers = #tpu.dot_dimension_numbers<[1], [0], [0], [1], [0, 0, 1, 1], [], []>} : vector<8x64xf32>, vector<64x16xf32>, vector<8x16xf32> -> vector<8x16xf32>
    %c0_69 = arith.constant 0 : index
    %c0_70 = arith.constant 0 : index
    %473 = vector.load %arg8[%c0_69, %c0_70] : memref<1x16xf32, #tpu.memory_space<vmem>>, vector<1x16xf32>
    %474 = vector.broadcast %473 : vector<1x16xf32> to vector<8x16xf32>
    %475 = arith.addf %472, %474 : vector<8x16xf32>
    %cst_71 = arith.constant dense<0xFF800000> : vector<8xf32>
    %476 = vector.multi_reduction <maximumf>, %475, %cst_71 [1] : vector<8x16xf32> to vector<8xf32>
    %477 = vector.shape_cast %476 : vector<8xf32> to vector<8x1xf32>
    %478 = vector.broadcast %477 : vector<8x1xf32> to vector<8x16xf32>
    %479 = arith.subf %475, %478 : vector<8x16xf32>
    %480 = math.exp %479 : vector<8x16xf32>
    %cst_72 = arith.constant dense<0.000000e+00> : vector<8xf32>
    %481 = vector.multi_reduction <add>, %480, %cst_72 [1] : vector<8x16xf32> to vector<8xf32>
    %482 = vector.shape_cast %481 : vector<8xf32> to vector<8x1xf32>
    %483 = math.log %482 : vector<8x1xf32>
    %484 = vector.broadcast %483 : vector<8x1xf32> to vector<8x16xf32>
    %485 = arith.subf %479, %484 : vector<8x16xf32>
    %c0_73 = arith.constant 0 : index
    %c0_74 = arith.constant 0 : index
    %486 = vector.load %arg9[%c0_73, %c0_74] : memref<8x16xf32, #tpu.memory_space<vmem>>, vector<8x16xf32>
    tpu.vector_store %arg9[%c0_73, %c0_74], %485 {strides = array<i32>} : memref<8x16xf32, #tpu.memory_space<vmem>>, vector<8x16xf32>,
    return
  }
}

</mosaic_0001>

<llo_original>
// kernel: soffritto_forward.1
$region0: #{soffritto_forward.1}
  #allocation0 [shape = 'u32[]', space=smem, size = 0x4, offset = 0x4, fixed_abs, tag = 'smem constant byte address 0x4 - core index']
  #allocation1 [shape = 'u32[144,128]{1,0:T(1,128)}', space=vmem, size = 0x12000, scoped, tag = 'internal scratch']
  %s0 = inlined_call_operand.vmem [shape: f32[8,32], index: 0, kind: input, shape index: {}]
  %s1 = inlined_call_operand.vmem [shape: f32[32,256], index: 1, kind: input, shape index: {}]
  %s2 = inlined_call_operand.vmem [shape: f32[64,256], index: 2, kind: input, shape index: {}]
  %s3 = inlined_call_operand.vmem [shape: f32[1,256], index: 3, kind: input, shape index: {}]
  %s4 = inlined_call_operand.vmem [shape: f32[64,256], index: 4, kind: input, shape index: {}]
  %s5 = inlined_call_operand.vmem [shape: f32[64,256], index: 5, kind: input, shape index: {}]
  %s6 = inlined_call_operand.vmem [shape: f32[1,256], index: 6, kind: input, shape index: {}]
  %s7 = inlined_call_operand.vmem [shape: f32[64,16], index: 7, kind: input, shape index: {}]
  %s8 = inlined_call_operand.vmem [shape: f32[1,16], index: 8, kind: input, shape index: {}]
  %s9 = inlined_call_operand.hbm [shape: f32[8,16], index: 9, kind: output, shape index: {}]
  %s10 = sld [smem:[#allocation0]]
  $region46: #{soffritto_forward.1} parent=0
    _
  %s12 = ssub.s32 1, %s10
  %s13 = scalar_select 0, %s12, %s10
  $region1: #{soffritto_forward.1} parent=0
    #allocation2 [shape = 'u8[4096]{0}', space=vmem, size = 0x1000, scoped, tag = 'output window, operand 0, single buffered']
    #allocation3 [shape = 's32[1]{0}', space=sflag, size = 0x4, scoped, tag = 'scoped memory for soffritto_forward.1']
    %14 = vsyncpa [#allocation3], 0
    // Predicated region
    $region2: #{soffritto_forward.1} parent=1 // pred_check
      _
    $region3: #{soffritto_forward.1} parent=1 // pred_check_branch
      %16 = sbr.rel (0) target = $region5
    $region4: #{soffritto_forward.1} parent=1 // pred_region
      _
    $region5: #{soffritto_forward.1} parent=1 // pred_fallthru
      _
    // Predicated region
    $region6: #{soffritto_forward.1} parent=1 // pred_check
      _
    $region7: #{soffritto_forward.1} parent=1 // pred_check_branch
      %18 = sbr.rel (0) target = $region9
    $region8: #{soffritto_forward.1} parent=1 // pred_region
      _
    $region9: #{soffritto_forward.1} parent=1 // pred_fallthru
      _
    // Predicated region
    $region10: #{soffritto_forward.1} parent=1 // pred_check
      _
    $region11: #{soffritto_forward.1} parent=1 // pred_check_branch
      %20 = sbr.rel (0) target = $region13
    $region12: #{soffritto_forward.1} parent=1 // pred_region
      _
    $region13: #{soffritto_forward.1} parent=1 // pred_fallthru
      _
    // Predicated region
    $region14: #{soffritto_forward.1} parent=1 // pred_check
      _
    $region15: #{soffritto_forward.1} parent=1 // pred_check_branch
      %22 = sbr.rel (0) target = $region17
    $region16: #{soffritto_forward.1} parent=1 // pred_region
      _
    $region17: #{soffritto_forward.1} parent=1 // pred_fallthru
      _
    // Predicated region
    $region18: #{soffritto_forward.1} parent=1 // pred_check
      _
    $region19: #{soffritto_forward.1} parent=1 // pred_check_branch
      %24 = sbr.rel (0) target = $region21
    $region20: #{soffritto_forward.1} parent=1 // pred_region
      _
    $region21: #{soffritto_forward.1} parent=1 // pred_fallthru
      _
    // Predicated region
    $region22: #{soffritto_forward.1} parent=1 // pred_check
      _
    $region23: #{soffritto_forward.1} parent=1 // pred_check_branch
      %26 = sbr.rel (0) target = $region25
    $region24: #{soffritto_forward.1} parent=1 // pred_region
      _
    $region25: #{soffritto_forward.1} parent=1 // pred_fallthru
      _
    // Predicated region
    $region26: #{soffritto_forward.1} parent=1 // pred_check
      _
    $region27: #{soffritto_forward.1} parent=1 // pred_check_branch
      %28 = sbr.rel (0) target = $region29
    $region28: #{soffritto_forward.1} parent=1 // pred_region
      _
    $region29: #{soffritto_forward.1} parent=1 // pred_fallthru
      _
    // Predicated region
    $region30: #{soffritto_forward.1} parent=1 // pred_check
      _
    $region31: #{soffritto_forward.1} parent=1 // pred_check_branch
      %30 = sbr.rel (0) target = $region33
    $region32: #{soffritto_forward.1} parent=1 // pred_region
      _
    $region33: #{soffritto_forward.1} parent=1 // pred_fallthru
      _
    // Predicated region
    $region34: #{soffritto_forward.1} parent=1 // pred_check
      _
    $region35: #{soffritto_forward.1} parent=1 // pred_check_branch
      %32 = sbr.rel (0) target = $region37
    $region36: #{soffritto_forward.1} parent=1 // pred_region
      _
    $region37: #{soffritto_forward.1} parent=1 // pred_fallthru
      _
    %v33 = vld [vmem:[%s0] sm:$0xff]
    %v34 = vld [vmem:[%s2] sm:$0xff]
    %v35 = vld [vmem:[%s2 + $0x8] sm:$0xff]
    %v36 = vld [vmem:[%s2 + $0x10] sm:$0xff]
    %v37 = vld [vmem:[%s2 + $0x18] sm:$0xff]
    %v38 = vld [vmem:[%s2 + $0x20] sm:$0xff]
    %v39 = vld [vmem:[%s2 + $0x28] sm:$0xff]
    %v40 = vld [vmem:[%s2 + $0x30] sm:$0xff]
    %v41 = vld [vmem:[%s2 + $0x38] sm:$0xff]
    %v42 = vld [vmem:[%s2 + $0x40] sm:$0xff]
    %v43 = vld [vmem:[%s2 + $0x48] sm:$0xff]
    %v44 = vld [vmem:[%s2 + $0x50] sm:$0xff]
    %v45 = vld [vmem:[%s2 + $0x58] sm:$0xff]
    %v46 = vld [vmem:[%s2 + $0x60] sm:$0xff]
    %v47 = vld [vmem:[%s2 + $0x68] sm:$0xff]
    %v48 = vld [vmem:[%s2 + $0x70] sm:$0xff]
    %v49 = vld [vmem:[%s2 + $0x78] sm:$0xff]
    %v50 = vld [vmem:[%s1] sm:$0xff]
    %v51 = vld [vmem:[%s1 + $0x8] sm:$0xff]
    %v52 = vld [vmem:[%s1 + $0x10] sm:$0xff]
    %v53 = vld [vmem:[%s1 + $0x18] sm:$0xff]
    %v54 = vld [vmem:[%s1 + $0x20] sm:$0xff]
    %v55 = vld [vmem:[%s1 + $0x28] sm:$0xff]
    %v56 = vld [vmem:[%s1 + $0x30] sm:$0xff]
    %v57 = vld [vmem:[%s1 + $0x38] sm:$0xff]
    %v58 = vld [vmem:[%s3] sm:$0x3]
    %v60 = vlaneseq
    %v61 = vshrl.u32 %v60, 7
    %v62 = vsub.s32 0, %v61
    %v63 = vrot.slane %v58, %v62
    %v64 = vlaneseq
    %v65 = vshrl.u32 %v64, 7
    %v66 = vsub.s32 1, %v65
    %v67 = vrot.slane %v58, %v66
    %vm70 = vcmask 261120
    %v72 = vsel %vm70, %v33, 0
    %74 = vmatprep.subr.mxu0 %v51
    %75 = vmatpush1.msra.mxu0 %v50
    %76 = vmatprep.subr.mxu0 %v53
    %77 = vmatpush1.msra.mxu0 %v52
    %78 = vmatprep.subr.mxu0 %v55
    %79 = vmatpush1.msra.mxu0 %v54
    %80 = vmatprep.subr.mxu0 %v57
    %81 = vmatpush1.msra.mxu0 %v56
    %82 = vmatprep.subr.mxu0 0.0
    %83 = vmatpush1.msra.mxu0 0.0
    %84 = vmatprep.subr.mxu0 0.0
    %85 = vmatpush1.msra.mxu0 0.0
    %86 = vmatprep.subr.mxu0 0.0
    %87 = vmatpush1.msra.mxu0 0.0
    %88 = vmatprep.subr.mxu0 0.0
    %89 = vmatpush1.msra.mxu0 0.0
    %90 = vmatprep.subr.mxu0 0.0
    %91 = vmatpush1.msra.mxu0 0.0
    %92 = vmatprep.subr.mxu0 0.0
    %93 = vmatpush1.msra.mxu0 0.0
    %94 = vmatprep.subr.mxu0 0.0
    %95 = vmatpush1.msra.mxu0 0.0
    %96 = vmatprep.subr.mxu0 0.0
    %97 = vmatpush1.msra.mxu0 0.0
    %98 = vmatprep.subr.mxu0 0.0
    %99 = vmatpush1.msra.mxu0 0.0
    %100 = vmatprep.subr.mxu0 0.0
    %101 = vmatpush1.msra.mxu0 0.0
    %102 = vmatprep.subr.mxu0 0.0
    %103 = vmatpush1.msra.mxu0 0.0
    %104 = vmatprep.subr.mxu0 0.0
    %105 = vmatpush1.msra.mxu0 0.0
    %106 = vmatprep.subr.mxu0 0.0
    %107 = vmatpush1.msra.mxu0 0.0
    %108 = vmatprep.subr.mxu0 0.0
    %109 = vmatpush1.msra.mxu0 0.0
    %110 = vmatprep.subr.mxu0 0.0
    %111 = vmatpush1.msra.mxu0 0.0
    %112 = vmatprep.subr.mxu0 0.0
    %113 = vmatpush1.msra.mxu0 0.0
    %114 = vmatprep.subr.mxu0 0.0
    %115 = vmatpush1.msra.mxu0 0.0
    %116 = vmatprep.subr.mxu0 0.0
    %117 = vmatpush1.msra.mxu0 0.0
    %118 = vmatprep.subr.mxu0 0.0
    %119 = vmatpush1.msra.mxu0 0.0
    %120 = vmatprep.subr.mxu0 0.0
    %121 = vmatpush1.msra.mxu0 0.0
    %122 = vmatprep.subr.mxu0 0.0
    %123 = vmatpush1.msra.mxu0 0.0
    %124 = vmatprep.subr.mxu0 0.0
    %125 = vmatpush1.msra.mxu0 0.0
    %126 = vmatprep.subr.mxu0 0.0
    %127 = vmatpush1.msra.mxu0 0.0
    %128 = vmatprep.subr.mxu0 0.0
    %129 = vmatpush1.msra.mxu0 0.0
    %130 = vmatprep.subr.mxu0 0.0
    %131 = vmatpush1.msra.mxu0 0.0
    %132 = vmatprep.subr.mxu0 0.0
    %133 = vmatpush1.msra.mxu0 0.0
    %134 = vmatprep.subr.mxu0 0.0
    %135 = vmatpush1.msra.mxu0 0.0
    %136 = vmatprep.subr.mxu0 0.0
    %137 = vmatpush1.msra.mxu0 0.0
    %138 = vmatprep.mubr.f32.mxu0 0.0
    %139 = vmatmul.mubr.f32.gmra.mrb[0].mxu0 %v72
    %v140 = vpop.f32.mrb[0].mxu0
    %v141 = vadd.f32 %v63, %v140
    %v142 = vpop.f32.mrb[0].mxu0
    %v143 = vadd.f32 %v67, %v142
    %144 = vdwg.mxu0
    %v147 = vrot.slane %v141, 6
    %v148 = vrot.slane %v143, 6
    %vm151 = vcmask 1040384
    %v152 = vsel %vm151, %v141, %v147
    %v153 = vsel %vm151, %v143, %v148
    %v154 = vrot.slane %v141, 1
    %v155 = vrot.slane %v143, 1
    %v158 = vrot.slane %v141, 5
    %v159 = vrot.slane %v143, 5
    %v162 = vsel %vm151, %v154, %v158
    %v163 = vsel %vm151, %v155, %v159
    %v164 = vrot.slane %v141, 2
    %v165 = vrot.slane %v143, 2
    %v168 = vrot.slane %v141, 4
    %v169 = vrot.slane %v143, 4
    %v172 = vsel %vm151, %v164, %v168
    %v173 = vsel %vm151, %v165, %v169
    %v174 = vrot.slane %v141, 3
    %v175 = vrot.slane %v143, 3
    %v178 = vsel %vm151, %v168, %v164
    %v179 = vsel %vm151, %v169, %v165
    %v180 = vsel %vm151, %v158, %v154
    %v181 = vsel %vm151, %v159, %v155
    %v182 = vsel %vm151, %v147, %v141
    %v183 = vsel %vm151, %v148, %v143
    %v184 = vrot.slane %v141, 7
    %v185 = vrot.slane %v143, 7
    %v188 = vsel %vm151, %v184, %v184
    %v189 = vsel %vm151, %v185, %v185
    %vm190 = vcmask 523264
    %v192 = vsel %vm190, 0.0, 0
    %194 = vmatprep.subr.mxu0 %v35
    %195 = vmatpush1.msra.mxu0 %v34
    %196 = vmatprep.subr.mxu0 %v37
    %197 = vmatpush1.msra.mxu0 %v36
    %198 = vmatprep.subr.mxu0 %v39
    %199 = vmatpush1.msra.mxu0 %v38
    %200 = vmatprep.subr.mxu0 %v41
    %201 = vmatpush1.msra.mxu0 %v40
    %202 = vmatprep.subr.mxu0 %v43
    %203 = vmatpush1.msra.mxu0 %v42
    %204 = vmatprep.subr.mxu0 %v45
    %205 = vmatpush1.msra.mxu0 %v44
    %206 = vmatprep.subr.mxu0 %v47
    %207 = vmatpush1.msra.mxu0 %v46
    %208 = vmatprep.subr.mxu0 %v49
    %209 = vmatpush1.msra.mxu0 %v48
    %210 = vmatprep.subr.mxu0 0.0
    %211 = vmatpush1.msra.mxu0 0.0
    %212 = vmatprep.subr.mxu0 0.0
    %213 = vmatpush1.msra.mxu0 0.0
    %214 = vmatprep.subr.mxu0 0.0
    %215 = vmatpush1.msra.mxu0 0.0
    %216 = vmatprep.subr.mxu0 0.0
    %217 = vmatpush1.msra.mxu0 0.0
    %218 = vmatprep.subr.mxu0 0.0
    %219 = vmatpush1.msra.mxu0 0.0
    %220 = vmatprep.subr.mxu0 0.0
    %221 = vmatpush1.msra.mxu0 0.0
    %222 = vmatprep.subr.mxu0 0.0
    %223 = vmatpush1.msra.mxu0 0.0
    %224 = vmatprep.subr.mxu0 0.0
    %225 = vmatpush1.msra.mxu0 0.0
    %226 = vmatprep.subr.mxu0 0.0
    %227 = vmatpush1.msra.mxu0 0.0
    %228 = vmatprep.subr.mxu0 0.0
    %229 = vmatpush1.msra.mxu0 0.0
    %230 = vmatprep.subr.mxu0 0.0
    %231 = vmatpush1.msra.mxu0 0.0
    %232 = vmatprep.subr.mxu0 0.0
    %233 = vmatpush1.msra.mxu0 0.0
    %234 = vmatprep.subr.mxu0 0.0
    %235 = vmatpush1.msra.mxu0 0.0
    %236 = vmatprep.subr.mxu0 0.0
    %237 = vmatpush1.msra.mxu0 0.0
    %238 = vmatprep.subr.mxu0 0.0
    %239 = vmatpush1.msra.mxu0 0.0
    %240 = vmatprep.subr.mxu0 0.0
    %241 = vmatpush1.msra.mxu0 0.0
    %242 = vmatprep.subr.mxu0 0.0
    %243 = vmatpush1.msra.mxu0 0.0
    %244 = vmatprep.subr.mxu0 0.0
    %245 = vmatpush1.msra.mxu0 0.0
    %246 = vmatprep.subr.mxu0 0.0
    %247 = vmatpush1.msra.mxu0 0.0
    %248 = vmatprep.subr.mxu0 0.0
    %249 = vmatpush1.msra.mxu0 0.0
    %250 = vmatprep.subr.mxu0 0.0
    %251 = vmatpush1.msra.mxu0 0.0
    %252 = vmatprep.subr.mxu0 0.0
    %253 = vmatpush1.msra.mxu0 0.0
    %254 = vmatprep.subr.mxu0 0.0
    %255 = vmatpush1.msra.mxu0 0.0
    %256 = vmatprep.subr.mxu0 0.0
    %257 = vmatpush1.msra.mxu0 0.0
    %258 = vmatprep.mubr.f32.mxu0 0.0
    %259 = vmatmul.mubr.f32.gmra.mrb[0].mxu0 %v192
    %v260 = vpop.f32.mrb[0].mxu0
    %v261 = vadd.f32 0.0, %v260
    %v262 = vpop.f32.mrb[0].mxu0
    %v263 = vadd.f32 0.0, %v262
    %264 = vdwg.mxu0
    %v265 = vadd.f32 %v152, %v261
    %v266 = vadd.f32 %v153, %v263
    %v267 = vxor.u32 %v265, 2147483648
    %v268 = vmul.f32 %v267, 1.442695
    %v269 = vpow.pop %v268
    %v270 = vadd.f32 %v269, 1.0
    %v271 = vrcp.pop %v270
    %v272 = vmul.f32 1.0, %v271
    %v273 = vtanh.pop %v266
    %v274 = vxor.u32 %v266, 2147483648
    %v275 = vmul.f32 %v274, 1.442695
    %v276 = vpow.pop %v275
    %v277 = vadd.f32 %v276, 1.0
    %v278 = vrcp.pop %v277
    %v279 = vmul.f32 1.0, %v278
    %v280 = vmul.f32 %v272, 0.0
    %v281 = vmul.f32 %v272, %v273
    %283 = vrot.lane.b32.xlu0 %v281, 64
    %v284 = vpop.permute.xlu0 %283
    %v286 = vadd.f32 %v280, %v284
    %v287 = vtanh.pop %v286
    %v288 = vmul.f32 %v279, %v287
    %290 = vrot.lane.b32.xlu0 %v288, 64
    %v291 = vpop.permute.xlu0 %290
    %v292 = vsel %vm190, %v291, 0
    %294 = vmatprep.subr.mxu0 %v35
    %295 = vmatpush1.msra.mxu0 %v34
    %296 = vmatprep.subr.mxu0 %v37
    %297 = vmatpush1.msra.mxu0 %v36
    %298 = vmatprep.subr.mxu0 %v39
    %299 = vmatpush1.msra.mxu0 %v38
    %300 = vmatprep.subr.mxu0 %v41
    %301 = vmatpush1.msra.mxu0 %v40
    %302 = vmatprep.subr.mxu0 %v43
    %303 = vmatpush1.msra.mxu0 %v42
    %304 = vmatprep.subr.mxu0 %v45
    %305 = vmatpush1.msra.mxu0 %v44
    %306 = vmatprep.subr.mxu0 %v47
    %307 = vmatpush1.msra.mxu0 %v46
    %308 = vmatprep.subr.mxu0 %v49
    %309 = vmatpush1.msra.mxu0 %v48
    %310 = vmatprep.subr.mxu0 0.0
    %311 = vmatpush1.msra.mxu0 0.0
    %312 = vmatprep.subr.mxu0 0.0
    %313 = vmatpush1.msra.mxu0 0.0
    %314 = vmatprep.subr.mxu0 0.0
    %315 = vmatpush1.msra.mxu0 0.0
    %316 = vmatprep.subr.mxu0 0.0
    %317 = vmatpush1.msra.mxu0 0.0
    %318 = vmatprep.subr.mxu0 0.0
    %319 = vmatpush1.msra.mxu0 0.0
    %320 = vmatprep.subr.mxu0 0.0
    %321 = vmatpush1.msra.mxu0 0.0
    %322 = vmatprep.subr.mxu0 0.0
    %323 = vmatpush1.msra.mxu0 0.0
    %324 = vmatprep.subr.mxu0 0.0
    %325 = vmatpush1.msra.mxu0 0.0
    %326 = vmatprep.subr.mxu0 0.0
    %327 = vmatpush1.msra.mxu0 0.0
    %328 = vmatprep.subr.mxu0 0.0
    %329 = vmatpush1.msra.mxu0 0.0
    %330 = vmatprep.subr.mxu0 0.0
    %331 = vmatpush1.msra.mxu0 0.0
    %332 = vmatprep.subr.mxu0 0.0
    %333 = vmatpush1.msra.mxu0 0.0
    %334 = vmatprep.subr.mxu0 0.0
    %335 = vmatpush1.msra.mxu0 0.0
    %336 = vmatprep.subr.mxu0 0.0
    %337 = vmatpush1.msra.mxu0 0.0
    %338 = vmatprep.subr.mxu0 0.0
    %339 = vmatpush1.msra.mxu0 0.0
    %340 = vmatprep.subr.mxu0 0.0
    %341 = vmatpush1.msra.mxu0 0.0
    %342 = vmatprep.subr.mxu0 0.0
    %343 = vmatpush1.msra.mxu0 0.0
    %344 = vmatprep.subr.mxu0 0.0
    %345 = vmatpush1.msra.mxu0 0.0
    %346 = vmatprep.subr.mxu0 0.0
    %347 = vmatpush1.msra.mxu0 0.0
    %348 = vmatprep.subr.mxu0 0.0
    %349 = vmatpush1.msra.mxu0 0.0
    %350 = vmatprep.subr.mxu0 0.0
    %351 = vmatpush1.msra.mxu0 0.0
    %352 = vmatprep.subr.mxu0 0.0
    %353 = vmatpush1.msra.mxu0 0.0
    %354 = vmatprep.subr.mxu0 0.0
    %355 = vmatpush1.msra.mxu0 0.0
    %356 = vmatprep.subr.mxu0 0.0
    %357 = vmatpush1.msra.mxu0 0.0
    %358 = vmatprep.mubr.f32.mxu0 0.0
    %359 = vmatmul.mubr.f32.gmra.mrb[0].mxu0 %v292
    %v360 = vpop.f32.mrb[0].mxu0
    %v361 = vadd.f32 0.0, %v360
    %v362 = vpop.f32.mrb[0].mxu0
    %v363 = vadd.f32 0.0, %v362
    %364 = vdwg.mxu0
    %v365 = vadd.f32 %v162, %v361
    %v366 = vadd.f32 %v163, %v363
    %v367 = vxor.u32 %v365, 2147483648
    %v368 = vmul.f32 %v367, 1.442695
    %v369 = vpow.pop %v368
    %v370 = vadd.f32 %v369, 1.0
    %v371 = vrcp.pop %v370
    %v372 = vmul.f32 1.0, %v371
    %v373 = vtanh.pop %v366
    %v374 = vxor.u32 %v366, 2147483648
    %v375 = vmul.f32 %v374, 1.442695
    %v376 = vpow.pop %v375
    %v377 = vadd.f32 %v376, 1.0
    %v378 = vrcp.pop %v377
    %v379 = vmul.f32 1.0, %v378
    %v380 = vmul.f32 %v372, %v286
    %v381 = vmul.f32 %v372, %v373
    %383 = vrot.lane.b32.xlu0 %v381, 64
    %v384 = vpop.permute.xlu0 %383
    %v386 = vadd.f32 %v380, %v384
    %v387 = vtanh.pop %v386
    %v388 = vmul.f32 %v379, %v387
    %390 = vrot.lane.b32.xlu0 %v388, 64
    %v391 = vpop.permute.xlu0 %390
    %v392 = vsel %vm190, %v391, 0
    %394 = vmatprep.subr.mxu0 %v35
    %395 = vmatpush1.msra.mxu0 %v34
    %396 = vmatprep.subr.mxu0 %v37
    %397 = vmatpush1.msra.mxu0 %v36
    %398 = vmatprep.subr.mxu0 %v39
    %399 = vmatpush1.msra.mxu0 %v38
    %400 = vmatprep.subr.mxu0 %v41
    %401 = vmatpush1.msra.mxu0 %v40
    %402 = vmatprep.subr.mxu0 %v43
    %403 = vmatpush1.msra.mxu0 %v42
    %404 = vmatprep.subr.mxu0 %v45
    %405 = vmatpush1.msra.mxu0 %v44
    %406 = vmatprep.subr.mxu0 %v47
    %407 = vmatpush1.msra.mxu0 %v46
    %408 = vmatprep.subr.mxu0 %v49
    %409 = vmatpush1.msra.mxu0 %v48
    %410 = vmatprep.subr.mxu0 0.0
    %411 = vmatpush1.msra.mxu0 0.0
    %412 = vmatprep.subr.mxu0 0.0
    %413 = vmatpush1.msra.mxu0 0.0
    %414 = vmatprep.subr.mxu0 0.0
    %415 = vmatpush1.msra.mxu0 0.0
    %416 = vmatprep.subr.mxu0 0.0
    %417 = vmatpush1.msra.mxu0 0.0
    %418 = vmatprep.subr.mxu0 0.0
    %419 = vmatpush1.msra.mxu0 0.0
    %420 = vmatprep.subr.mxu0 0.0
    %421 = vmatpush1.msra.mxu0 0.0
    %422 = vmatprep.subr.mxu0 0.0
    %423 = vmatpush1.msra.mxu0 0.0
    %424 = vmatprep.subr.mxu0 0.0
    %425 = vmatpush1.msra.mxu0 0.0
    %426 = vmatprep.subr.mxu0 0.0
    %427 = vmatpush1.msra.mxu0 0.0
    %428 = vmatprep.subr.mxu0 0.0
    %429 = vmatpush1.msra.mxu0 0.0
    %430 = vmatprep.subr.mxu0 0.0
    %431 = vmatpush1.msra.mxu0 0.0
    %432 = vmatprep.subr.mxu0 0.0
    %433 = vmatpush1.msra.mxu0 0.0
    %434 = vmatprep.subr.mxu0 0.0
    %435 = vmatpush1.msra.mxu0 0.0
    %436 = vmatprep.subr.mxu0 0.0
    %437 = vmatpush1.msra.mxu0 0.0
    %438 = vmatprep.subr.mxu0 0.0
    %439 = vmatpush1.msra.mxu0 0.0
    %440 = vmatprep.subr.mxu0 0.0
    %441 = vmatpush1.msra.mxu0 0.0
    %442 = vmatprep.subr.mxu0 0.0
    %443 = vmatpush1.msra.mxu0 0.0
    %444 = vmatprep.subr.mxu0 0.0
    %445 = vmatpush1.msra.mxu0 0.0
    %446 = vmatprep.subr.mxu0 0.0
    %447 = vmatpush1.msra.mxu0 0.0
    %448 = vmatprep.subr.mxu0 0.0
    %449 = vmatpush1.msra.mxu0 0.0
    %450 = vmatprep.subr.mxu0 0.0
    %451 = vmatpush1.msra.mxu0 0.0
    %452 = vmatprep.subr.mxu0 0.0
    %453 = vmatpush1.msra.mxu0 0.0
    %454 = vmatprep.subr.mxu0 0.0
    %455 = vmatpush1.msra.mxu0 0.0
    %456 = vmatprep.subr.mxu0 0.0
    %457 = vmatpush1.msra.mxu0 0.0
    %458 = vmatprep.mubr.f32.mxu0 0.0
    %459 = vmatmul.mubr.f32.gmra.mrb[0].mxu0 %v392
    %v460 = vpop.f32.mrb[0].mxu0
    %v461 = vadd.f32 0.0, %v460
    %v462 = vpop.f32.mrb[0].mxu0
    %v463 = vadd.f32 0.0, %v462
    %464 = vdwg.mxu0
    %v465 = vadd.f32 %v172, %v461
    %v466 = vadd.f32 %v173, %v463
    %v467 = vxor.u32 %v465, 2147483648
    %v468 = vmul.f32 %v467, 1.442695
    %v469 = vpow.pop %v468
    %v470 = vadd.f32 %v469, 1.0
    %v471 = vrcp.pop %v470
    %v472 = vmul.f32 1.0, %v471
    %v473 = vtanh.pop %v466
    %v474 = vxor.u32 %v466, 2147483648
    %v475 = vmul.f32 %v474, 1.442695
    %v476 = vpow.pop %v475
    %v477 = vadd.f32 %v476, 1.0
    %v478 = vrcp.pop %v477
    %v479 = vmul.f32 1.0, %v478
    %v480 = vmul.f32 %v472, %v386
    %v481 = vmul.f32 %v472, %v473
    %483 = vrot.lane.b32.xlu0 %v481, 64
    %v484 = vpop.permute.xlu0 %483
    %v486 = vadd.f32 %v480, %v484
    %v487 = vtanh.pop %v486
    %v488 = vmul.f32 %v479, %v487
    %490 = vrot.lane.b32.xlu0 %v488, 64
    %v491 = vpop.permute.xlu0 %490
    %v492 = vsel %vm190, %v491, 0
    %494 = vmatprep.subr.mxu0 %v35
    %495 = vmatpush1.msra.mxu0 %v34
    %496 = vmatprep.subr.mxu0 %v37
    %497 = vmatpush1.msra.mxu0 %v36
    %498 = vmatprep.subr.mxu0 %v39
    %499 = vmatpush1.msra.mxu0 %v38
    %500 = vmatprep.subr.mxu0 %v41
    %501 = vmatpush1.msra.mxu0 %v40
    %502 = vmatprep.subr.mxu0 %v43
    %503 = vmatpush1.msra.mxu0 %v42
    %504 = vmatprep.subr.mxu0 %v45
    %505 = vmatpush1.msra.mxu0 %v44
    %506 = vmatprep.subr.mxu0 %v47
    %507 = vmatpush1.msra.mxu0 %v46
    %508 = vmatprep.subr.mxu0 %v49
    %509 = vmatpush1.msra.mxu0 %v48
    %510 = vmatprep.subr.mxu0 0.0
    %511 = vmatpush1.msra.mxu0 0.0
    %512 = vmatprep.subr.mxu0 0.0
    %513 = vmatpush1.msra.mxu0 0.0
    %514 = vmatprep.subr.mxu0 0.0
    %515 = vmatpush1.msra.mxu0 0.0
    %516 = vmatprep.subr.mxu0 0.0
    %517 = vmatpush1.msra.mxu0 0.0
    %518 = vmatprep.subr.mxu0 0.0
    %519 = vmatpush1.msra.mxu0 0.0
    %520 = vmatprep.subr.mxu0 0.0
    %521 = vmatpush1.msra.mxu0 0.0
    %522 = vmatprep.subr.mxu0 0.0
    %523 = vmatpush1.msra.mxu0 0.0
    %524 = vmatprep.subr.mxu0 0.0
    %525 = vmatpush1.msra.mxu0 0.0
    %526 = vmatprep.subr.mxu0 0.0
    %527 = vmatpush1.msra.mxu0 0.0
    %528 = vmatprep.subr.mxu0 0.0
    %529 = vmatpush1.msra.mxu0 0.0
    %530 = vmatprep.subr.mxu0 0.0
    %531 = vmatpush1.msra.mxu0 0.0
    %532 = vmatprep.subr.mxu0 0.0
    %533 = vmatpush1.msra.mxu0 0.0
    %534 = vmatprep.subr.mxu0 0.0
    %535 = vmatpush1.msra.mxu0 0.0
    %536 = vmatprep.subr.mxu0 0.0
    %537 = vmatpush1.msra.mxu0 0.0
    %538 = vmatprep.subr.mxu0 0.0
    %539 = vmatpush1.msra.mxu0 0.0
    %540 = vmatprep.subr.mxu0 0.0
    %541 = vmatpush1.msra.mxu0 0.0
    %542 = vmatprep.subr.mxu0 0.0
    %543 = vmatpush1.msra.mxu0 0.0
    %544 = vmatprep.subr.mxu0 0.0
    %545 = vmatpush1.msra.mxu0 0.0
    %546 = vmatprep.subr.mxu0 0.0
    %547 = vmatpush1.msra.mxu0 0.0
    %548 = vmatprep.subr.mxu0 0.0
    %549 = vmatpush1.msra.mxu0 0.0
    %550 = vmatprep.subr.mxu0 0.0
    %551 = vmatpush1.msra.mxu0 0.0
    %552 = vmatprep.subr.mxu0 0.0
    %553 = vmatpush1.msra.mxu0 0.0
    %554 = vmatprep.subr.mxu0 0.0
    %555 = vmatpush1.msra.mxu0 0.0
    %556 = vmatprep.subr.mxu0 0.0
    %557 = vmatpush1.msra.mxu0 0.0
    %558 = vmatprep.mubr.f32.mxu0 0.0
    %559 = vmatmul.mubr.f32.gmra.mrb[0].mxu0 %v492
    %v560 = vpop.f32.mrb[0].mxu0
    %v561 = vadd.f32 0.0, %v560
    %v562 = vpop.f32.mrb[0].mxu0
    %v563 = vadd.f32 0.0, %v562
    %564 = vdwg.mxu0
    %v565 = vadd.f32 %v174, %v561
    %v566 = vadd.f32 %v175, %v563
    %v567 = vxor.u32 %v565, 2147483648
    %v568 = vmul.f32 %v567, 1.442695
    %v569 = vpow.pop %v568
    %v570 = vadd.f32 %v569, 1.0
    %v571 = vrcp.pop %v570
    %v572 = vmul.f32 1.0, %v571
    %v573 = vtanh.pop %v566
    %v574 = vxor.u32 %v566, 2147483648
    %v575 = vmul.f32 %v574, 1.442695
    %v576 = vpow.pop %v575
    %v577 = vadd.f32 %v576, 1.0
    %v578 = vrcp.pop %v577
    %v579 = vmul.f32 1.0, %v578
    %v580 = vmul.f32 %v572, %v486
    %v581 = vmul.f32 %v572, %v573
    %583 = vrot.lane.b32.xlu0 %v581, 64
    %v584 = vpop.permute.xlu0 %583
    %v586 = vadd.f32 %v580, %v584
    %v587 = vtanh.pop %v586
    %v588 = vmul.f32 %v579, %v587
    %590 = vrot.lane.b32.xlu0 %v588, 64
    %v591 = vpop.permute.xlu0 %590
    %v592 = vsel %vm190, %v591, 0
    %594 = vmatprep.subr.mxu0 %v35
    %595 = vmatpush1.msra.mxu0 %v34
    %596 = vmatprep.subr.mxu0 %v37
    %597 = vmatpush1.msra.mxu0 %v36
    %598 = vmatprep.subr.mxu0 %v39
    %599 = vmatpush1.msra.mxu0 %v38
    %600 = vmatprep.subr.mxu0 %v41
    %601 = vmatpush1.msra.mxu0 %v40
    %602 = vmatprep.subr.mxu0 %v43
    %603 = vmatpush1.msra.mxu0 %v42
    %604 = vmatprep.subr.mxu0 %v45
    %605 = vmatpush1.msra.mxu0 %v44
    %606 = vmatprep.subr.mxu0 %v47
    %607 = vmatpush1.msra.mxu0 %v46
    %608 = vmatprep.subr.mxu0 %v49
    %609 = vmatpush1.msra.mxu0 %v48
    %610 = vmatprep.subr.mxu0 0.0
    %611 = vmatpush1.msra.mxu0 0.0
    %612 = vmatprep.subr.mxu0 0.0
    %613 = vmatpush1.msra.mxu0 0.0
    %614 = vmatprep.subr.mxu0 0.0
    %615 = vmatpush1.msra.mxu0 0.0
    %616 = vmatprep.subr.mxu0 0.0
    %617 = vmatpush1.msra.mxu0 0.0
    %618 = vmatprep.subr.mxu0 0.0
    %619 = vmatpush1.msra.mxu0 0.0
    %620 = vmatprep.subr.mxu0 0.0
    %621 = vmatpush1.msra.mxu0 0.0
    %622 = vmatprep.subr.mxu0 0.0
    %623 = vmatpush1.msra.mxu0 0.0
    %624 = vmatprep.subr.mxu0 0.0
    %625 = vmatpush1.msra.mxu0 0.0
    %626 = vmatprep.subr.mxu0 0.0
    %627 = vmatpush1.msra.mxu0 0.0
    %628 = vmatprep.subr.mxu0 0.0
    %629 = vmatpush1.msra.mxu0 0.0
    %630 = vmatprep.subr.mxu0 0.0
    %631 = vmatpush1.msra.mxu0 0.0
    %632 = vmatprep.subr.mxu0 0.0
    %633 = vmatpush1.msra.mxu0 0.0
    %634 = vmatprep.subr.mxu0 0.0
    %635 = vmatpush1.msra.mxu0 0.0
    %636 = vmatprep.subr.mxu0 0.0
    %637 = vmatpush1.msra.mxu0 0.0
    %638 = vmatprep.subr.mxu0 0.0
    %639 = vmatpush1.msra.mxu0 0.0
    %640 = vmatprep.subr.mxu0 0.0
    %641 = vmatpush1.msra.mxu0 0.0
    %642 = vmatprep.subr.mxu0 0.0
    %643 = vmatpush1.msra.mxu0 0.0
    %644 = vmatprep.subr.mxu0 0.0
    %645 = vmatpush1.msra.mxu0 0.0
    %646 = vmatprep.subr.mxu0 0.0
    %647 = vmatpush1.msra.mxu0 0.0
    %648 = vmatprep.subr.mxu0 0.0
    %649 = vmatpush1.msra.mxu0 0.0
    %650 = vmatprep.subr.mxu0 0.0
    %651 = vmatpush1.msra.mxu0 0.0
    %652 = vmatprep.subr.mxu0 0.0
    %653 = vmatpush1.msra.mxu0 0.0
    %654 = vmatprep.subr.mxu0 0.0
    %655 = vmatpush1.msra.mxu0 0.0
    %656 = vmatprep.subr.mxu0 0.0
    %657 = vmatpush1.msra.mxu0 0.0
    %658 = vmatprep.mubr.f32.mxu0 0.0
    %659 = vmatmul.mubr.f32.gmra.mrb[0].mxu0 %v592
    %v660 = vpop.f32.mrb[0].mxu0
    %v661 = vadd.f32 0.0, %v660
    %v662 = vpop.f32.mrb[0].mxu0
    %v663 = vadd.f32 0.0, %v662
    %664 = vdwg.mxu0
    %v665 = vadd.f32 %v178, %v661
    %v666 = vadd.f32 %v179, %v663
    %v667 = vxor.u32 %v665, 2147483648
    %v668 = vmul.f32 %v667, 1.442695
    %v669 = vpow.pop %v668
    %v670 = vadd.f32 %v669, 1.0
    %v671 = vrcp.pop %v670
    %v672 = vmul.f32 1.0, %v671
    %v673 = vtanh.pop %v666
    %v674 = vxor.u32 %v666, 2147483648
    %v675 = vmul.f32 %v674, 1.442695
    %v676 = vpow.pop %v675
    %v677 = vadd.f32 %v676, 1.0
    %v678 = vrcp.pop %v677
    %v679 = vmul.f32 1.0, %v678
    %v680 = vmul.f32 %v672, %v586
    %v681 = vmul.f32 %v672, %v673
    %683 = vrot.lane.b32.xlu0 %v681, 64
    %v684 = vpop.permute.xlu0 %683
    %v686 = vadd.f32 %v680, %v684
    %v687 = vtanh.pop %v686
    %v688 = vmul.f32 %v679, %v687
    %690 = vrot.lane.b32.xlu0 %v688, 64
    %v691 = vpop.permute.xlu0 %690
    %v692 = vsel %vm190, %v691, 0
    %694 = vmatprep.subr.mxu0 %v35
    %695 = vmatpush1.msra.mxu0 %v34
    %696 = vmatprep.subr.mxu0 %v37
    %697 = vmatpush1.msra.mxu0 %v36
    %698 = vmatprep.subr.mxu0 %v39
    %699 = vmatpush1.msra.mxu0 %v38
    %700 = vmatprep.subr.mxu0 %v41
    %701 = vmatpush1.msra.mxu0 %v40
    %702 = vmatprep.subr.mxu0 %v43
    %703 = vmatpush1.msra.mxu0 %v42
    %704 = vmatprep.subr.mxu0 %v45
    %705 = vmatpush1.msra.mxu0 %v44
    %706 = vmatprep.subr.mxu0 %v47
    %707 = vmatpush1.msra.mxu0 %v46
    %708 = vmatprep.subr.mxu0 %v49
    %709 = vmatpush1.msra.mxu0 %v48
    %710 = vmatprep.subr.mxu0 0.0
    %711 = vmatpush1.msra.mxu0 0.0
    %712 = vmatprep.subr.mxu0 0.0
    %713 = vmatpush1.msra.mxu0 0.0
    %714 = vmatprep.subr.mxu0 0.0
    %715 = vmatpush1.msra.mxu0 0.0
    %716 = vmatprep.subr.mxu0 0.0
    %717 = vmatpush1.msra.mxu0 0.0
    %718 = vmatprep.subr.mxu0 0.0
    %719 = vmatpush1.msra.mxu0 0.0
    %720 = vmatprep.subr.mxu0 0.0
    %721 = vmatpush1.msra.mxu0 0.0
    %722 = vmatprep.subr.mxu0 0.0
    %723 = vmatpush1.msra.mxu0 0.0
    %724 = vmatprep.subr.mxu0 0.0
    %725 = vmatpush1.msra.mxu0 0.0
    %726 = vmatprep.subr.mxu0 0.0
    %727 = vmatpush1.msra.mxu0 0.0
    %728 = vmatprep.subr.mxu0 0.0
    %729 = vmatpush1.msra.mxu0 0.0
    %730 = vmatprep.subr.mxu0 0.0
    %731 = vmatpush1.msra.mxu0 0.0
    %732 = vmatprep.subr.mxu0 0.0
    %733 = vmatpush1.msra.mxu0 0.0
    %734 = vmatprep.subr.mxu0 0.0
    %735 = vmatpush1.msra.mxu0 0.0
    %736 = vmatprep.subr.mxu0 0.0
    %737 = vmatpush1.msra.mxu0 0.0
    %738 = vmatprep.subr.mxu0 0.0
    %739 = vmatpush1.msra.mxu0 0.0
    %740 = vmatprep.subr.mxu0 0.0
    %741 = vmatpush1.msra.mxu0 0.0
    %742 = vmatprep.subr.mxu0 0.0
    %743 = vmatpush1.msra.mxu0 0.0
    %744 = vmatprep.subr.mxu0 0.0
    %745 = vmatpush1.msra.mxu0 0.0
    %746 = vmatprep.subr.mxu0 0.0
    %747 = vmatpush1.msra.mxu0 0.0
    %748 = vmatprep.subr.mxu0 0.0
    %749 = vmatpush1.msra.mxu0 0.0
    %750 = vmatprep.subr.mxu0 0.0
    %751 = vmatpush1.msra.mxu0 0.0
    %752 = vmatprep.subr.mxu0 0.0
    %753 = vmatpush1.msra.mxu0 0.0
    %754 = vmatprep.subr.mxu0 0.0
    %755 = vmatpush1.msra.mxu0 0.0
    %756 = vmatprep.subr.mxu0 0.0
    %757 = vmatpush1.msra.mxu0 0.0
    %758 = vmatprep.mubr.f32.mxu0 0.0
    %759 = vmatmul.mubr.f32.gmra.mrb[0].mxu0 %v692
    %v760 = vpop.f32.mrb[0].mxu0
    %v761 = vadd.f32 0.0, %v760
    %v762 = vpop.f32.mrb[0].mxu0
    %v763 = vadd.f32 0.0, %v762
    %764 = vdwg.mxu0
    %v765 = vadd.f32 %v180, %v761
    %v766 = vadd.f32 %v181, %v763
    %v767 = vxor.u32 %v765, 2147483648
    %v768 = vmul.f32 %v767, 1.442695
    %v769 = vpow.pop %v768
    %v770 = vadd.f32 %v769, 1.0
    %v771 = vrcp.pop %v770
    %v772 = vmul.f32 1.0, %v771
    %v773 = vtanh.pop %v766
    %v774 = vxor.u32 %v766, 2147483648
    %v775 = vmul.f32 %v774, 1.442695
    %v776 = vpow.pop %v775
    %v777 = vadd.f32 %v776, 1.0
    %v778 = vrcp.pop %v777
    %v779 = vmul.f32 1.0, %v778
    %v780 = vmul.f32 %v772, %v686
    %v781 = vmul.f32 %v772, %v773
    %783 = vrot.lane.b32.xlu0 %v781, 64
    %v784 = vpop.permute.xlu0 %783
    %v786 = vadd.f32 %v780, %v784
    %v787 = vtanh.pop %v786
    %v788 = vmul.f32 %v779, %v787
    %790 = vrot.lane.b32.xlu0 %v788, 64
    %v791 = vpop.permute.xlu0 %790
    %v792 = vsel %vm190, %v791, 0
    %794 = vmatprep.subr.mxu0 %v35
    %795 = vmatpush1.msra.mxu0 %v34
    %796 = vmatprep.subr.mxu0 %v37
    %797 = vmatpush1.msra.mxu0 %v36
    %798 = vmatprep.subr.mxu0 %v39
    %799 = vmatpush1.msra.mxu0 %v38
    %800 = vmatprep.subr.mxu0 %v41
    %801 = vmatpush1.msra.mxu0 %v40
    %802 = vmatprep.subr.mxu0 %v43
    %803 = vmatpush1.msra.mxu0 %v42
    %804 = vmatprep.subr.mxu0 %v45
    %805 = vmatpush1.msra.mxu0 %v44
    %806 = vmatprep.subr.mxu0 %v47
    %807 = vmatpush1.msra.mxu0 %v46
    %808 = vmatprep.subr.mxu0 %v49
    %809 = vmatpush1.msra.mxu0 %v48
    %810 = vmatprep.subr.mxu0 0.0
    %811 = vmatpush1.msra.mxu0 0.0
    %812 = vmatprep.subr.mxu0 0.0
    %813 = vmatpush1.msra.mxu0 0.0
    %814 = vmatprep.subr.mxu0 0.0
    %815 = vmatpush1.msra.mxu0 0.0
    %816 = vmatprep.subr.mxu0 0.0
    %817 = vmatpush1.msra.mxu0 0.0
    %818 = vmatprep.subr.mxu0 0.0
    %819 = vmatpush1.msra.mxu0 0.0
    %820 = vmatprep.subr.mxu0 0.0
    %821 = vmatpush1.msra.mxu0 0.0
    %822 = vmatprep.subr.mxu0 0.0
    %823 = vmatpush1.msra.mxu0 0.0
    %824 = vmatprep.subr.mxu0 0.0
    %825 = vmatpush1.msra.mxu0 0.0
    %826 = vmatprep.subr.mxu0 0.0
    %827 = vmatpush1.msra.mxu0 0.0
    %828 = vmatprep.subr.mxu0 0.0
    %829 = vmatpush1.msra.mxu0 0.0
    %830 = vmatprep.subr.mxu0 0.0
    %831 = vmatpush1.msra.mxu0 0.0
    %832 = vmatprep.subr.mxu0 0.0
    %833 = vmatpush1.msra.mxu0 0.0
    %834 = vmatprep.subr.mxu0 0.0
    %835 = vmatpush1.msra.mxu0 0.0
    %836 = vmatprep.subr.mxu0 0.0
    %837 = vmatpush1.msra.mxu0 0.0
    %838 = vmatprep.subr.mxu0 0.0
    %839 = vmatpush1.msra.mxu0 0.0
    %840 = vmatprep.subr.mxu0 0.0
    %841 = vmatpush1.msra.mxu0 0.0
    %842 = vmatprep.subr.mxu0 0.0
    %843 = vmatpush1.msra.mxu0 0.0
    %844 = vmatprep.subr.mxu0 0.0
    %845 = vmatpush1.msra.mxu0 0.0
    %846 = vmatprep.subr.mxu0 0.0
    %847 = vmatpush1.msra.mxu0 0.0
    %848 = vmatprep.subr.mxu0 0.0
    %849 = vmatpush1.msra.mxu0 0.0
    %850 = vmatprep.subr.mxu0 0.0
    %851 = vmatpush1.msra.mxu0 0.0
    %852 = vmatprep.subr.mxu0 0.0
    %853 = vmatpush1.msra.mxu0 0.0
    %854 = vmatprep.subr.mxu0 0.0
    %855 = vmatpush1.msra.mxu0 0.0
    %856 = vmatprep.subr.mxu0 0.0
    %857 = vmatpush1.msra.mxu0 0.0
    %858 = vmatprep.mubr.f32.mxu0 0.0
    %859 = vmatmul.mubr.f32.gmra.mrb[0].mxu0 %v792
    %v860 = vpop.f32.mrb[0].mxu0
    %v861 = vadd.f32 0.0, %v860
    %v862 = vpop.f32.mrb[0].mxu0
    %v863 = vadd.f32 0.0, %v862
    %864 = vdwg.mxu0
    %v865 = vadd.f32 %v182, %v861
    %v866 = vadd.f32 %v183, %v863
    %v867 = vxor.u32 %v865, 2147483648
    %v868 = vmul.f32 %v867, 1.442695
    %v869 = vpow.pop %v868
    %v870 = vadd.f32 %v869, 1.0
    %v871 = vrcp.pop %v870
    %v872 = vmul.f32 1.0, %v871
    %v873 = vtanh.pop %v866
    %v874 = vxor.u32 %v866, 2147483648
    %v875 = vmul.f32 %v874, 1.442695
    %v876 = vpow.pop %v875
    %v877 = vadd.f32 %v876, 1.0
    %v878 = vrcp.pop %v877
    %v879 = vmul.f32 1.0, %v878
    %v880 = vmul.f32 %v872, %v786
    %v881 = vmul.f32 %v872, %v873
    %883 = vrot.lane.b32.xlu0 %v881, 64
    %v884 = vpop.permute.xlu0 %883
    %v886 = vadd.f32 %v880, %v884
    %v887 = vtanh.pop %v886
    %v888 = vmul.f32 %v879, %v887
    %890 = vrot.lane.b32.xlu0 %v888, 64
    %v891 = vpop.permute.xlu0 %890
    %v892 = vsel %vm190, %v891, 0
    %894 = vmatprep.subr.mxu0 %v35
    %895 = vmatpush1.msra.mxu0 %v34
    %896 = vmatprep.subr.mxu0 %v37
    %897 = vmatpush1.msra.mxu0 %v36
    %898 = vmatprep.subr.mxu0 %v39
    %899 = vmatpush1.msra.mxu0 %v38
    %900 = vmatprep.subr.mxu0 %v41
    %901 = vmatpush1.msra.mxu0 %v40
    %902 = vmatprep.subr.mxu0 %v43
    %903 = vmatpush1.msra.mxu0 %v42
    %904 = vmatprep.subr.mxu0 %v45
    %905 = vmatpush1.msra.mxu0 %v44
    %906 = vmatprep.subr.mxu0 %v47
    %907 = vmatpush1.msra.mxu0 %v46
    %908 = vmatprep.subr.mxu0 %v49
    %909 = vmatpush1.msra.mxu0 %v48
    %910 = vmatprep.subr.mxu0 0.0
    %911 = vmatpush1.msra.mxu0 0.0
    %912 = vmatprep.subr.mxu0 0.0
    %913 = vmatpush1.msra.mxu0 0.0
    %914 = vmatprep.subr.mxu0 0.0
    %915 = vmatpush1.msra.mxu0 0.0
    %916 = vmatprep.subr.mxu0 0.0
    %917 = vmatpush1.msra.mxu0 0.0
    %918 = vmatprep.subr.mxu0 0.0
    %919 = vmatpush1.msra.mxu0 0.0
    %920 = vmatprep.subr.mxu0 0.0
    %921 = vmatpush1.msra.mxu0 0.0
    %922 = vmatprep.subr.mxu0 0.0
    %923 = vmatpush1.msra.mxu0 0.0
    %924 = vmatprep.subr.mxu0 0.0
    %925 = vmatpush1.msra.mxu0 0.0
    %926 = vmatprep.subr.mxu0 0.0
    %927 = vmatpush1.msra.mxu0 0.0
    %928 = vmatprep.subr.mxu0 0.0
    %929 = vmatpush1.msra.mxu0 0.0
    %930 = vmatprep.subr.mxu0 0.0
    %931 = vmatpush1.msra.mxu0 0.0
    %932 = vmatprep.subr.mxu0 0.0
    %933 = vmatpush1.msra.mxu0 0.0
    %934 = vmatprep.subr.mxu0 0.0
    %935 = vmatpush1.msra.mxu0 0.0
    %936 = vmatprep.subr.mxu0 0.0
    %937 = vmatpush1.msra.mxu0 0.0
    %938 = vmatprep.subr.mxu0 0.0
    %939 = vmatpush1.msra.mxu0 0.0
    %940 = vmatprep.subr.mxu0 0.0
    %941 = vmatpush1.msra.mxu0 0.0
    %942 = vmatprep.subr.mxu0 0.0
    %943 = vmatpush1.msra.mxu0 0.0
    %944 = vmatprep.subr.mxu0 0.0
    %945 = vmatpush1.msra.mxu0 0.0
    %946 = vmatprep.subr.mxu0 0.0
    %947 = vmatpush1.msra.mxu0 0.0
    %948 = vmatprep.subr.mxu0 0.0
    %949 = vmatpush1.msra.mxu0 0.0
    %950 = vmatprep.subr.mxu0 0.0
    %951 = vmatpush1.msra.mxu0 0.0
    %952 = vmatprep.subr.mxu0 0.0
    %953 = vmatpush1.msra.mxu0 0.0
    %954 = vmatprep.subr.mxu0 0.0
    %955 = vmatpush1.msra.mxu0 0.0
    %956 = vmatprep.subr.mxu0 0.0
    %957 = vmatpush1.msra.mxu0 0.0
    %958 = vmatprep.mubr.f32.mxu0 0.0
    %959 = vmatmul.mubr.f32.gmra.mrb[0].mxu0 %v892
    %v960 = vpop.f32.mrb[0].mxu0
    %v961 = vadd.f32 0.0, %v960
    %v962 = vpop.f32.mrb[0].mxu0
    %v963 = vadd.f32 0.0, %v962
    %964 = vdwg.mxu0
    %v965 = vadd.f32 %v188, %v961
    %v966 = vadd.f32 %v189, %v963
    %v967 = vxor.u32 %v965, 2147483648
    %v968 = vmul.f32 %v967, 1.442695
    %v969 = vpow.pop %v968
    %v970 = vadd.f32 %v969, 1.0
    %v971 = vrcp.pop %v970
    %v972 = vmul.f32 1.0, %v971
    %v973 = vtanh.pop %v966
    %v974 = vxor.u32 %v966, 2147483648
    %v975 = vmul.f32 %v974, 1.442695
    %v976 = vpow.pop %v975
    %v977 = vadd.f32 %v976, 1.0
    %v978 = vrcp.pop %v977
    %v979 = vmul.f32 1.0, %v978
    %v980 = vmul.f32 %v972, %v886
    %v981 = vmul.f32 %v972, %v973
    %983 = vrot.lane.b32.xlu0 %v981, 64
    %v984 = vpop.permute.xlu0 %983
    %v986 = vadd.f32 %v980, %v984
    %v987 = vtanh.pop %v986
    %v988 = vmul.f32 %v979, %v987
    %v989 = vrot.slane %v388, 7
    %v991 = vrot.slane %v488, 6
    %v993 = vrot.slane %v588, 5
    %v995 = vrot.slane %v688, 4
    %v997 = vrot.slane %v788, 3
    %v999 = vrot.slane %v888, 2
    %v1002 = vrot.slane %v988, 1
    %v1004 = vsel %vm151, %v288, %v989
    %vm1005 = vcmask 1041408
    %v1006 = vsel %vm1005, %v1004, %v991
    %vm1007 = vcmask 1042432
    %v1008 = vsel %vm1007, %v1006, %v993
    %vm1009 = vcmask 1043456
    %v1010 = vsel %vm1009, %v1008, %v995
    %vm1011 = vcmask 1044480
    %v1012 = vsel %vm1011, %v1010, %v997
    %vm1013 = vcmask 1045504
    %v1014 = vsel %vm1013, %v1012, %v999
    %vm1015 = vcmask 1046528
    %v1016 = vsel %vm1015, %v1014, %v1002
    %v1017 = vrot.slane %v788, 7
    %v1019 = vrot.slane %v688, 6
    %v1021 = vrot.slane %v488, 4
    %v1023 = vrot.slane %v388, 3
    %v1025 = vrot.slane %v288, 2
    %v1027 = vsel %vm151, %v1002, %v888
    %v1028 = vsel %vm1005, %v1027, %v1017
    %v1029 = vsel %vm1007, %v1028, %v1019
    %v1030 = vsel %vm1009, %v1029, %v993
    %v1031 = vsel %vm1011, %v1030, %v1021
    %v1032 = vsel %vm1013, %v1031, %v1023
    %v1033 = vsel %vm1015, %v1032, %v1025
    %1035 = vrot.lane.b32.xlu0 %v1016, 64
    %v1036 = vpop.permute.xlu0 %1035
    %1039 = vrot.lane.b32.xlu0 %v1033, 64
    %v1040 = vpop.permute.xlu0 %1039
    %v1042 = vsel %vm70, %v1036, %v1040
    %v1043 = vld [vmem:[%s5] sm:$0xff]
    %v1044 = vld [vmem:[%s5 + $0x8] sm:$0xff]
    %v1045 = vld [vmem:[%s5 + $0x10] sm:$0xff]
    %v1046 = vld [vmem:[%s5 + $0x18] sm:$0xff]
    %v1047 = vld [vmem:[%s5 + $0x20] sm:$0xff]
    %v1048 = vld [vmem:[%s5 + $0x28] sm:$0xff]
    %v1049 = vld [vmem:[%s5 + $0x30] sm:$0xff]
    %v1050 = vld [vmem:[%s5 + $0x38] sm:$0xff]
    %v1051 = vld [vmem:[%s5 + $0x40] sm:$0xff]
    %v1052 = vld [vmem:[%s5 + $0x48] sm:$0xff]
    %v1053 = vld [vmem:[%s5 + $0x50] sm:$0xff]
    %v1054 = vld [vmem:[%s5 + $0x58] sm:$0xff]
    %v1055 = vld [vmem:[%s5 + $0x60] sm:$0xff]
    %v1056 = vld [vmem:[%s5 + $0x68] sm:$0xff]
    %v1057 = vld [vmem:[%s5 + $0x70] sm:$0xff]
    %v1058 = vld [vmem:[%s5 + $0x78] sm:$0xff]
    %v1059 = vld [vmem:[%s4] sm:$0xff]
    %v1060 = vld [vmem:[%s4 + $0x8] sm:$0xff]
    %v1061 = vld [vmem:[%s4 + $0x10] sm:$0xff]
    %v1062 = vld [vmem:[%s4 + $0x18] sm:$0xff]
    %v1063 = vld [vmem:[%s4 + $0x20] sm:$0xff]
    %v1064 = vld [vmem:[%s4 + $0x28] sm:$0xff]
    %v1065 = vld [vmem:[%s4 + $0x30] sm:$0xff]
    %v1066 = vld [vmem:[%s4 + $0x38] sm:$0xff]
    %v1067 = vld [vmem:[%s4 + $0x40] sm:$0xff]
    %v1068 = vld [vmem:[%s4 + $0x48] sm:$0xff]
    %v1069 = vld [vmem:[%s4 + $0x50] sm:$0xff]
    %v1070 = vld [vmem:[%s4 + $0x58] sm:$0xff]
    %v1071 = vld [vmem:[%s4 + $0x60] sm:$0xff]
    %v1072 = vld [vmem:[%s4 + $0x68] sm:$0xff]
    %v1073 = vld [vmem:[%s4 + $0x70] sm:$0xff]
    %v1074 = vld [vmem:[%s4 + $0x78] sm:$0xff]
    %v1075 = vld [vmem:[%s6] sm:$0x3]
    %v1077 = vlaneseq
    %v1078 = vshrl.u32 %v1077, 7
    %v1079 = vsub.s32 0, %v1078
    %v1080 = vrot.slane %v1075, %v1079
    %v1081 = vlaneseq
    %v1082 = vshrl.u32 %v1081, 7
    %v1083 = vsub.s32 1, %v1082
    %v1084 = vrot.slane %v1075, %v1083
    %v1088 = vsel %vm190, %v1042, 0
    %1090 = vmatprep.subr.mxu0 %v1060
    %1091 = vmatpush1.msra.mxu0 %v1059
    %1092 = vmatprep.subr.mxu0 %v1062
    %1093 = vmatpush1.msra.mxu0 %v1061
    %1094 = vmatprep.subr.mxu0 %v1064
    %1095 = vmatpush1.msra.mxu0 %v1063
    %1096 = vmatprep.subr.mxu0 %v1066
    %1097 = vmatpush1.msra.mxu0 %v1065
    %1098 = vmatprep.subr.mxu0 %v1068
    %1099 = vmatpush1.msra.mxu0 %v1067
    %1100 = vmatprep.subr.mxu0 %v1070
    %1101 = vmatpush1.msra.mxu0 %v1069
    %1102 = vmatprep.subr.mxu0 %v1072
    %1103 = vmatpush1.msra.mxu0 %v1071
    %1104 = vmatprep.subr.mxu0 %v1074
    %1105 = vmatpush1.msra.mxu0 %v1073
    %1106 = vmatprep.subr.mxu0 0.0
    %1107 = vmatpush1.msra.mxu0 0.0
    %1108 = vmatprep.subr.mxu0 0.0
    %1109 = vmatpush1.msra.mxu0 0.0
    %1110 = vmatprep.subr.mxu0 0.0
    %1111 = vmatpush1.msra.mxu0 0.0
    %1112 = vmatprep.subr.mxu0 0.0
    %1113 = vmatpush1.msra.mxu0 0.0
    %1114 = vmatprep.subr.mxu0 0.0
    %1115 = vmatpush1.msra.mxu0 0.0
    %1116 = vmatprep.subr.mxu0 0.0
    %1117 = vmatpush1.msra.mxu0 0.0
    %1118 = vmatprep.subr.mxu0 0.0
    %1119 = vmatpush1.msra.mxu0 0.0
    %1120 = vmatprep.subr.mxu0 0.0
    %1121 = vmatpush1.msra.mxu0 0.0
    %1122 = vmatprep.subr.mxu0 0.0
    %1123 = vmatpush1.msra.mxu0 0.0
    %1124 = vmatprep.subr.mxu0 0.0
    %1125 = vmatpush1.msra.mxu0 0.0
    %1126 = vmatprep.subr.mxu0 0.0
    %1127 = vmatpush1.msra.mxu0 0.0
    %1128 = vmatprep.subr.mxu0 0.0
    %1129 = vmatpush1.msra.mxu0 0.0
    %1130 = vmatprep.subr.mxu0 0.0
    %1131 = vmatpush1.msra.mxu0 0.0
    %1132 = vmatprep.subr.mxu0 0.0
    %1133 = vmatpush1.msra.mxu0 0.0
    %1134 = vmatprep.subr.mxu0 0.0
    %1135 = vmatpush1.msra.mxu0 0.0
    %1136 = vmatprep.subr.mxu0 0.0
    %1137 = vmatpush1.msra.mxu0 0.0
    %1138 = vmatprep.subr.mxu0 0.0
    %1139 = vmatpush1.msra.mxu0 0.0
    %1140 = vmatprep.subr.mxu0 0.0
    %1141 = vmatpush1.msra.mxu0 0.0
    %1142 = vmatprep.subr.mxu0 0.0
    %1143 = vmatpush1.msra.mxu0 0.0
    %1144 = vmatprep.subr.mxu0 0.0
    %1145 = vmatpush1.msra.mxu0 0.0
    %1146 = vmatprep.subr.mxu0 0.0
    %1147 = vmatpush1.msra.mxu0 0.0
    %1148 = vmatprep.subr.mxu0 0.0
    %1149 = vmatpush1.msra.mxu0 0.0
    %1150 = vmatprep.subr.mxu0 0.0
    %1151 = vmatpush1.msra.mxu0 0.0
    %1152 = vmatprep.subr.mxu0 0.0
    %1153 = vmatpush1.msra.mxu0 0.0
    %1154 = vmatprep.mubr.f32.mxu0 0.0
    %1155 = vmatmul.mubr.f32.gmra.mrb[0].mxu0 %v1088
    %v1156 = vpop.f32.mrb[0].mxu0
    %v1157 = vadd.f32 %v1080, %v1156
    %v1158 = vpop.f32.mrb[0].mxu0
    %v1159 = vadd.f32 %v1084, %v1158
    %1160 = vdwg.mxu0
    %v1163 = vrot.slane %v1157, 6
    %v1164 = vrot.slane %v1159, 6
    %v1167 = vsel %vm151, %v1157, %v1163
    %v1168 = vsel %vm151, %v1159, %v1164
    %v1169 = vrot.slane %v1157, 1
    %v1170 = vrot.slane %v1159, 1
    %v1173 = vrot.slane %v1157, 5
    %v1174 = vrot.slane %v1159, 5
    %v1177 = vsel %vm151, %v1169, %v1173
    %v1178 = vsel %vm151, %v1170, %v1174
    %v1179 = vrot.slane %v1157, 2
    %v1180 = vrot.slane %v1159, 2
    %v1183 = vrot.slane %v1157, 4
    %v1184 = vrot.slane %v1159, 4
    %v1187 = vsel %vm151, %v1179, %v1183
    %v1188 = vsel %vm151, %v1180, %v1184
    %v1189 = vrot.slane %v1157, 3
    %v1190 = vrot.slane %v1159, 3
    %v1193 = vsel %vm151, %v1183, %v1179
    %v1194 = vsel %vm151, %v1184, %v1180
    %v1195 = vsel %vm151, %v1173, %v1169
    %v1196 = vsel %vm151, %v1174, %v1170
    %v1197 = vsel %vm151, %v1163, %v1157
    %v1198 = vsel %vm151, %v1164, %v1159
    %v1199 = vrot.slane %v1157, 7
    %v1200 = vrot.slane %v1159, 7
    %v1203 = vsel %vm151, %v1199, %v1199
    %v1204 = vsel %vm151, %v1200, %v1200
    %1205 = vmatprep.subr.mxu0 %v1044
    %1206 = vmatpush1.msra.mxu0 %v1043
    %1207 = vmatprep.subr.mxu0 %v1046
    %1208 = vmatpush1.msra.mxu0 %v1045
    %1209 = vmatprep.subr.mxu0 %v1048
    %1210 = vmatpush1.msra.mxu0 %v1047
    %1211 = vmatprep.subr.mxu0 %v1050
    %1212 = vmatpush1.msra.mxu0 %v1049
    %1213 = vmatprep.subr.mxu0 %v1052
    %1214 = vmatpush1.msra.mxu0 %v1051
    %1215 = vmatprep.subr.mxu0 %v1054
    %1216 = vmatpush1.msra.mxu0 %v1053
    %1217 = vmatprep.subr.mxu0 %v1056
    %1218 = vmatpush1.msra.mxu0 %v1055
    %1219 = vmatprep.subr.mxu0 %v1058
    %1220 = vmatpush1.msra.mxu0 %v1057
    %1221 = vmatprep.subr.mxu0 0.0
    %1222 = vmatpush1.msra.mxu0 0.0
    %1223 = vmatprep.subr.mxu0 0.0
    %1224 = vmatpush1.msra.mxu0 0.0
    %1225 = vmatprep.subr.mxu0 0.0
    %1226 = vmatpush1.msra.mxu0 0.0
    %1227 = vmatprep.subr.mxu0 0.0
    %1228 = vmatpush1.msra.mxu0 0.0
    %1229 = vmatprep.subr.mxu0 0.0
    %1230 = vmatpush1.msra.mxu0 0.0
    %1231 = vmatprep.subr.mxu0 0.0
    %1232 = vmatpush1.msra.mxu0 0.0
    %1233 = vmatprep.subr.mxu0 0.0
    %1234 = vmatpush1.msra.mxu0 0.0
    %1235 = vmatprep.subr.mxu0 0.0
    %1236 = vmatpush1.msra.mxu0 0.0
    %1237 = vmatprep.subr.mxu0 0.0
    %1238 = vmatpush1.msra.mxu0 0.0
    %1239 = vmatprep.subr.mxu0 0.0
    %1240 = vmatpush1.msra.mxu0 0.0
    %1241 = vmatprep.subr.mxu0 0.0
    %1242 = vmatpush1.msra.mxu0 0.0
    %1243 = vmatprep.subr.mxu0 0.0
    %1244 = vmatpush1.msra.mxu0 0.0
    %1245 = vmatprep.subr.mxu0 0.0
    %1246 = vmatpush1.msra.mxu0 0.0
    %1247 = vmatprep.subr.mxu0 0.0
    %1248 = vmatpush1.msra.mxu0 0.0
    %1249 = vmatprep.subr.mxu0 0.0
    %1250 = vmatpush1.msra.mxu0 0.0
    %1251 = vmatprep.subr.mxu0 0.0
    %1252 = vmatpush1.msra.mxu0 0.0
    %1253 = vmatprep.subr.mxu0 0.0
    %1254 = vmatpush1.msra.mxu0 0.0
    %1255 = vmatprep.subr.mxu0 0.0
    %1256 = vmatpush1.msra.mxu0 0.0
    %1257 = vmatprep.subr.mxu0 0.0
    %1258 = vmatpush1.msra.mxu0 0.0
    %1259 = vmatprep.subr.mxu0 0.0
    %1260 = vmatpush1.msra.mxu0 0.0
    %1261 = vmatprep.subr.mxu0 0.0
    %1262 = vmatpush1.msra.mxu0 0.0
    %1263 = vmatprep.subr.mxu0 0.0
    %1264 = vmatpush1.msra.mxu0 0.0
    %1265 = vmatprep.subr.mxu0 0.0
    %1266 = vmatpush1.msra.mxu0 0.0
    %1267 = vmatprep.subr.mxu0 0.0
    %1268 = vmatpush1.msra.mxu0 0.0
    %1269 = vmatprep.mubr.f32.mxu0 0.0
    %1270 = vmatmul.mubr.f32.gmra.mrb[0].mxu0 %v192
    %v1271 = vpop.f32.mrb[0].mxu0
    %v1272 = vadd.f32 0.0, %v1271
    %v1273 = vpop.f32.mrb[0].mxu0
    %v1274 = vadd.f32 0.0, %v1273
    %1275 = vdwg.mxu0
    %v1276 = vadd.f32 %v1167, %v1272
    %v1277 = vadd.f32 %v1168, %v1274
    %v1278 = vxor.u32 %v1276, 2147483648
    %v1279 = vmul.f32 %v1278, 1.442695
    %v1280 = vpow.pop %v1279
    %v1281 = vadd.f32 %v1280, 1.0
    %v1282 = vrcp.pop %v1281
    %v1283 = vmul.f32 1.0, %v1282
    %v1284 = vtanh.pop %v1277
    %v1285 = vxor.u32 %v1277, 2147483648
    %v1286 = vmul.f32 %v1285, 1.442695
    %v1287 = vpow.pop %v1286
    %v1288 = vadd.f32 %v1287, 1.0
    %v1289 = vrcp.pop %v1288
    %v1290 = vmul.f32 1.0, %v1289
    %v1291 = vmul.f32 %v1283, 0.0
    %v1292 = vmul.f32 %v1283, %v1284
    %1294 = vrot.lane.b32.xlu0 %v1292, 64
    %v1295 = vpop.permute.xlu0 %1294
    %v1297 = vadd.f32 %v1291, %v1295
    %v1298 = vtanh.pop %v1297
    %v1299 = vmul.f32 %v1290, %v1298
    %1301 = vrot.lane.b32.xlu0 %v1299, 64
    %v1302 = vpop.permute.xlu0 %1301
    %v1303 = vsel %vm190, %v1302, 0
    %1305 = vmatprep.subr.mxu0 %v1044
    %1306 = vmatpush1.msra.mxu0 %v1043
    %1307 = vmatprep.subr.mxu0 %v1046
    %1308 = vmatpush1.msra.mxu0 %v1045
    %1309 = vmatprep.subr.mxu0 %v1048
    %1310 = vmatpush1.msra.mxu0 %v1047
    %1311 = vmatprep.subr.mxu0 %v1050
    %1312 = vmatpush1.msra.mxu0 %v1049
    %1313 = vmatprep.subr.mxu0 %v1052
    %1314 = vmatpush1.msra.mxu0 %v1051
    %1315 = vmatprep.subr.mxu0 %v1054
    %1316 = vmatpush1.msra.mxu0 %v1053
    %1317 = vmatprep.subr.mxu0 %v1056
    %1318 = vmatpush1.msra.mxu0 %v1055
    %1319 = vmatprep.subr.mxu0 %v1058
    %1320 = vmatpush1.msra.mxu0 %v1057
    %1321 = vmatprep.subr.mxu0 0.0
    %1322 = vmatpush1.msra.mxu0 0.0
    %1323 = vmatprep.subr.mxu0 0.0
    %1324 = vmatpush1.msra.mxu0 0.0
    %1325 = vmatprep.subr.mxu0 0.0
    %1326 = vmatpush1.msra.mxu0 0.0
    %1327 = vmatprep.subr.mxu0 0.0
    %1328 = vmatpush1.msra.mxu0 0.0
    %1329 = vmatprep.subr.mxu0 0.0
    %1330 = vmatpush1.msra.mxu0 0.0
    %1331 = vmatprep.subr.mxu0 0.0
    %1332 = vmatpush1.msra.mxu0 0.0
    %1333 = vmatprep.subr.mxu0 0.0
    %1334 = vmatpush1.msra.mxu0 0.0
    %1335 = vmatprep.subr.mxu0 0.0
    %1336 = vmatpush1.msra.mxu0 0.0
    %1337 = vmatprep.subr.mxu0 0.0
    %1338 = vmatpush1.msra.mxu0 0.0
    %1339 = vmatprep.subr.mxu0 0.0
    %1340 = vmatpush1.msra.mxu0 0.0
    %1341 = vmatprep.subr.mxu0 0.0
    %1342 = vmatpush1.msra.mxu0 0.0
    %1343 = vmatprep.subr.mxu0 0.0
    %1344 = vmatpush1.msra.mxu0 0.0
    %1345 = vmatprep.subr.mxu0 0.0
    %1346 = vmatpush1.msra.mxu0 0.0
    %1347 = vmatprep.subr.mxu0 0.0
    %1348 = vmatpush1.msra.mxu0 0.0
    %1349 = vmatprep.subr.mxu0 0.0
    %1350 = vmatpush1.msra.mxu0 0.0
    %1351 = vmatprep.subr.mxu0 0.0
    %1352 = vmatpush1.msra.mxu0 0.0
    %1353 = vmatprep.subr.mxu0 0.0
    %1354 = vmatpush1.msra.mxu0 0.0
    %1355 = vmatprep.subr.mxu0 0.0
    %1356 = vmatpush1.msra.mxu0 0.0
    %1357 = vmatprep.subr.mxu0 0.0
    %1358 = vmatpush1.msra.mxu0 0.0
    %1359 = vmatprep.subr.mxu0 0.0
    %1360 = vmatpush1.msra.mxu0 0.0
    %1361 = vmatprep.subr.mxu0 0.0
    %1362 = vmatpush1.msra.mxu0 0.0
    %1363 = vmatprep.subr.mxu0 0.0
    %1364 = vmatpush1.msra.mxu0 0.0
    %1365 = vmatprep.subr.mxu0 0.0
    %1366 = vmatpush1.msra.mxu0 0.0
    %1367 = vmatprep.subr.mxu0 0.0
    %1368 = vmatpush1.msra.mxu0 0.0
    %1369 = vmatprep.mubr.f32.mxu0 0.0
    %1370 = vmatmul.mubr.f32.gmra.mrb[0].mxu0 %v1303
    %v1371 = vpop.f32.mrb[0].mxu0
    %v1372 = vadd.f32 0.0, %v1371
    %v1373 = vpop.f32.mrb[0].mxu0
    %v1374 = vadd.f32 0.0, %v1373
    %1375 = vdwg.mxu0
    %v1376 = vadd.f32 %v1177, %v1372
    %v1377 = vadd.f32 %v1178, %v1374
    %v1378 = vxor.u32 %v1376, 2147483648
    %v1379 = vmul.f32 %v1378, 1.442695
    %v1380 = vpow.pop %v1379
    %v1381 = vadd.f32 %v1380, 1.0
    %v1382 = vrcp.pop %v1381
    %v1383 = vmul.f32 1.0, %v1382
    %v1384 = vtanh.pop %v1377
    %v1385 = vxor.u32 %v1377, 2147483648
    %v1386 = vmul.f32 %v1385, 1.442695
    %v1387 = vpow.pop %v1386
    %v1388 = vadd.f32 %v1387, 1.0
    %v1389 = vrcp.pop %v1388
    %v1390 = vmul.f32 1.0, %v1389
    %v1391 = vmul.f32 %v1383, %v1297
    %v1392 = vmul.f32 %v1383, %v1384
    %1394 = vrot.lane.b32.xlu0 %v1392, 64
    %v1395 = vpop.permute.xlu0 %1394
    %v1397 = vadd.f32 %v1391, %v1395
    %v1398 = vtanh.pop %v1397
    %v1399 = vmul.f32 %v1390, %v1398
    %1401 = vrot.lane.b32.xlu0 %v1399, 64
    %v1402 = vpop.permute.xlu0 %1401
    %v1403 = vsel %vm190, %v1402, 0
    %1405 = vmatprep.subr.mxu0 %v1044
    %1406 = vmatpush1.msra.mxu0 %v1043
    %1407 = vmatprep.subr.mxu0 %v1046
    %1408 = vmatpush1.msra.mxu0 %v1045
    %1409 = vmatprep.subr.mxu0 %v1048
    %1410 = vmatpush1.msra.mxu0 %v1047
    %1411 = vmatprep.subr.mxu0 %v1050
    %1412 = vmatpush1.msra.mxu0 %v1049
    %1413 = vmatprep.subr.mxu0 %v1052
    %1414 = vmatpush1.msra.mxu0 %v1051
    %1415 = vmatprep.subr.mxu0 %v1054
    %1416 = vmatpush1.msra.mxu0 %v1053
    %1417 = vmatprep.subr.mxu0 %v1056
    %1418 = vmatpush1.msra.mxu0 %v1055
    %1419 = vmatprep.subr.mxu0 %v1058
    %1420 = vmatpush1.msra.mxu0 %v1057
    %1421 = vmatprep.subr.mxu0 0.0
    %1422 = vmatpush1.msra.mxu0 0.0
    %1423 = vmatprep.subr.mxu0 0.0
    %1424 = vmatpush1.msra.mxu0 0.0
    %1425 = vmatprep.subr.mxu0 0.0
    %1426 = vmatpush1.msra.mxu0 0.0
    %1427 = vmatprep.subr.mxu0 0.0
    %1428 = vmatpush1.msra.mxu0 0.0
    %1429 = vmatprep.subr.mxu0 0.0
    %1430 = vmatpush1.msra.mxu0 0.0
    %1431 = vmatprep.subr.mxu0 0.0
    %1432 = vmatpush1.msra.mxu0 0.0
    %1433 = vmatprep.subr.mxu0 0.0
    %1434 = vmatpush1.msra.mxu0 0.0
    %1435 = vmatprep.subr.mxu0 0.0
    %1436 = vmatpush1.msra.mxu0 0.0
    %1437 = vmatprep.subr.mxu0 0.0
    %1438 = vmatpush1.msra.mxu0 0.0
    %1439 = vmatprep.subr.mxu0 0.0
    %1440 = vmatpush1.msra.mxu0 0.0
    %1441 = vmatprep.subr.mxu0 0.0
    %1442 = vmatpush1.msra.mxu0 0.0
    %1443 = vmatprep.subr.mxu0 0.0
    %1444 = vmatpush1.msra.mxu0 0.0
    %1445 = vmatprep.subr.mxu0 0.0
    %1446 = vmatpush1.msra.mxu0 0.0
    %1447 = vmatprep.subr.mxu0 0.0
    %1448 = vmatpush1.msra.mxu0 0.0
    %1449 = vmatprep.subr.mxu0 0.0
    %1450 = vmatpush1.msra.mxu0 0.0
    %1451 = vmatprep.subr.mxu0 0.0
    %1452 = vmatpush1.msra.mxu0 0.0
    %1453 = vmatprep.subr.mxu0 0.0
    %1454 = vmatpush1.msra.mxu0 0.0
    %1455 = vmatprep.subr.mxu0 0.0
    %1456 = vmatpush1.msra.mxu0 0.0
    %1457 = vmatprep.subr.mxu0 0.0
    %1458 = vmatpush1.msra.mxu0 0.0
    %1459 = vmatprep.subr.mxu0 0.0
    %1460 = vmatpush1.msra.mxu0 0.0
    %1461 = vmatprep.subr.mxu0 0.0
    %1462 = vmatpush1.msra.mxu0 0.0
    %1463 = vmatprep.subr.mxu0 0.0
    %1464 = vmatpush1.msra.mxu0 0.0
    %1465 = vmatprep.subr.mxu0 0.0
    %1466 = vmatpush1.msra.mxu0 0.0
    %1467 = vmatprep.subr.mxu0 0.0
    %1468 = vmatpush1.msra.mxu0 0.0
    %1469 = vmatprep.mubr.f32.mxu0 0.0
    %1470 = vmatmul.mubr.f32.gmra.mrb[0].mxu0 %v1403
    %v1471 = vpop.f32.mrb[0].mxu0
    %v1472 = vadd.f32 0.0, %v1471
    %v1473 = vpop.f32.mrb[0].mxu0
    %v1474 = vadd.f32 0.0, %v1473
    %1475 = vdwg.mxu0
    %v1476 = vadd.f32 %v1187, %v1472
    %v1477 = vadd.f32 %v1188, %v1474
    %v1478 = vxor.u32 %v1476, 2147483648
    %v1479 = vmul.f32 %v1478, 1.442695
    %v1480 = vpow.pop %v1479
    %v1481 = vadd.f32 %v1480, 1.0
    %v1482 = vrcp.pop %v1481
    %v1483 = vmul.f32 1.0, %v1482
    %v1484 = vtanh.pop %v1477
    %v1485 = vxor.u32 %v1477, 2147483648
    %v1486 = vmul.f32 %v1485, 1.442695
    %v1487 = vpow.pop %v1486
    %v1488 = vadd.f32 %v1487, 1.0
    %v1489 = vrcp.pop %v1488
    %v1490 = vmul.f32 1.0, %v1489
    %v1491 = vmul.f32 %v1483, %v1397
    %v1492 = vmul.f32 %v1483, %v1484
    %1494 = vrot.lane.b32.xlu0 %v1492, 64
    %v1495 = vpop.permute.xlu0 %1494
    %v1497 = vadd.f32 %v1491, %v1495
    %v1498 = vtanh.pop %v1497
    %v1499 = vmul.f32 %v1490, %v1498
    %1501 = vrot.lane.b32.xlu0 %v1499, 64
    %v1502 = vpop.permute.xlu0 %1501
    %v1503 = vsel %vm190, %v1502, 0
    %1505 = vmatprep.subr.mxu0 %v1044
    %1506 = vmatpush1.msra.mxu0 %v1043
    %1507 = vmatprep.subr.mxu0 %v1046
    %1508 = vmatpush1.msra.mxu0 %v1045
    %1509 = vmatprep.subr.mxu0 %v1048
    %1510 = vmatpush1.msra.mxu0 %v1047
    %1511 = vmatprep.subr.mxu0 %v1050
    %1512 = vmatpush1.msra.mxu0 %v1049
    %1513 = vmatprep.subr.mxu0 %v1052
    %1514 = vmatpush1.msra.mxu0 %v1051
    %1515 = vmatprep.subr.mxu0 %v1054
    %1516 = vmatpush1.msra.mxu0 %v1053
    %1517 = vmatprep.subr.mxu0 %v1056
    %1518 = vmatpush1.msra.mxu0 %v1055
    %1519 = vmatprep.subr.mxu0 %v1058
    %1520 = vmatpush1.msra.mxu0 %v1057
    %1521 = vmatprep.subr.mxu0 0.0
    %1522 = vmatpush1.msra.mxu0 0.0
    %1523 = vmatprep.subr.mxu0 0.0
    %1524 = vmatpush1.msra.mxu0 0.0
    %1525 = vmatprep.subr.mxu0 0.0
    %1526 = vmatpush1.msra.mxu0 0.0
    %1527 = vmatprep.subr.mxu0 0.0
    %1528 = vmatpush1.msra.mxu0 0.0
    %1529 = vmatprep.subr.mxu0 0.0
    %1530 = vmatpush1.msra.mxu0 0.0
    %1531 = vmatprep.subr.mxu0 0.0
    %1532 = vmatpush1.msra.mxu0 0.0
    %1533 = vmatprep.subr.mxu0 0.0
    %1534 = vmatpush1.msra.mxu0 0.0
    %1535 = vmatprep.subr.mxu0 0.0
    %1536 = vmatpush1.msra.mxu0 0.0
    %1537 = vmatprep.subr.mxu0 0.0
    %1538 = vmatpush1.msra.mxu0 0.0
    %1539 = vmatprep.subr.mxu0 0.0
    %1540 = vmatpush1.msra.mxu0 0.0
    %1541 = vmatprep.subr.mxu0 0.0
    %1542 = vmatpush1.msra.mxu0 0.0
    %1543 = vmatprep.subr.mxu0 0.0
    %1544 = vmatpush1.msra.mxu0 0.0
    %1545 = vmatprep.subr.mxu0 0.0
    %1546 = vmatpush1.msra.mxu0 0.0
    %1547 = vmatprep.subr.mxu0 0.0
    %1548 = vmatpush1.msra.mxu0 0.0
    %1549 = vmatprep.subr.mxu0 0.0
    %1550 = vmatpush1.msra.mxu0 0.0
    %1551 = vmatprep.subr.mxu0 0.0
    %1552 = vmatpush1.msra.mxu0 0.0
    %1553 = vmatprep.subr.mxu0 0.0
    %1554 = vmatpush1.msra.mxu0 0.0
    %1555 = vmatprep.subr.mxu0 0.0
    %1556 = vmatpush1.msra.mxu0 0.0
    %1557 = vmatprep.subr.mxu0 0.0
    %1558 = vmatpush1.msra.mxu0 0.0
    %1559 = vmatprep.subr.mxu0 0.0
    %1560 = vmatpush1.msra.mxu0 0.0
    %1561 = vmatprep.subr.mxu0 0.0
    %1562 = vmatpush1.msra.mxu0 0.0
    %1563 = vmatprep.subr.mxu0 0.0
    %1564 = vmatpush1.msra.mxu0 0.0
    %1565 = vmatprep.subr.mxu0 0.0
    %1566 = vmatpush1.msra.mxu0 0.0
    %1567 = vmatprep.subr.mxu0 0.0
    %1568 = vmatpush1.msra.mxu0 0.0
    %1569 = vmatprep.mubr.f32.mxu0 0.0
    %1570 = vmatmul.mubr.f32.gmra.mrb[0].mxu0 %v1503
    %v1571 = vpop.f32.mrb[0].mxu0
    %v1572 = vadd.f32 0.0, %v1571
    %v1573 = vpop.f32.mrb[0].mxu0
    %v1574 = vadd.f32 0.0, %v1573
    %1575 = vdwg.mxu0
    %v1576 = vadd.f32 %v1189, %v1572
    %v1577 = vadd.f32 %v1190, %v1574
    %v1578 = vxor.u32 %v1576, 2147483648
    %v1579 = vmul.f32 %v1578, 1.442695
    %v1580 = vpow.pop %v1579
    %v1581 = vadd.f32 %v1580, 1.0
    %v1582 = vrcp.pop %v1581
    %v1583 = vmul.f32 1.0, %v1582
    %v1584 = vtanh.pop %v1577
    %v1585 = vxor.u32 %v1577, 2147483648
    %v1586 = vmul.f32 %v1585, 1.442695
    %v1587 = vpow.pop %v1586
    %v1588 = vadd.f32 %v1587, 1.0
    %v1589 = vrcp.pop %v1588
    %v1590 = vmul.f32 1.0, %v1589
    %v1591 = vmul.f32 %v1583, %v1497
    %v1592 = vmul.f32 %v1583, %v1584
    %1594 = vrot.lane.b32.xlu0 %v1592, 64
    %v1595 = vpop.permute.xlu0 %1594
    %v1597 = vadd.f32 %v1591, %v1595
    %v1598 = vtanh.pop %v1597
    %v1599 = vmul.f32 %v1590, %v1598
    %1601 = vrot.lane.b32.xlu0 %v1599, 64
    %v1602 = vpop.permute.xlu0 %1601
    %v1603 = vsel %vm190, %v1602, 0
    %1605 = vmatprep.subr.mxu0 %v1044
    %1606 = vmatpush1.msra.mxu0 %v1043
    %1607 = vmatprep.subr.mxu0 %v1046
    %1608 = vmatpush1.msra.mxu0 %v1045
    %1609 = vmatprep.subr.mxu0 %v1048
    %1610 = vmatpush1.msra.mxu0 %v1047
    %1611 = vmatprep.subr.mxu0 %v1050
    %1612 = vmatpush1.msra.mxu0 %v1049
    %1613 = vmatprep.subr.mxu0 %v1052
    %1614 = vmatpush1.msra.mxu0 %v1051
    %1615 = vmatprep.subr.mxu0 %v1054
    %1616 = vmatpush1.msra.mxu0 %v1053
    %1617 = vmatprep.subr.mxu0 %v1056
    %1618 = vmatpush1.msra.mxu0 %v1055
    %1619 = vmatprep.subr.mxu0 %v1058
    %1620 = vmatpush1.msra.mxu0 %v1057
    %1621 = vmatprep.subr.mxu0 0.0
    %1622 = vmatpush1.msra.mxu0 0.0
    %1623 = vmatprep.subr.mxu0 0.0
    %1624 = vmatpush1.msra.mxu0 0.0
    %1625 = vmatprep.subr.mxu0 0.0
    %1626 = vmatpush1.msra.mxu0 0.0
    %1627 = vmatprep.subr.mxu0 0.0
    %1628 = vmatpush1.msra.mxu0 0.0
    %1629 = vmatprep.subr.mxu0 0.0
    %1630 = vmatpush1.msra.mxu0 0.0
    %1631 = vmatprep.subr.mxu0 0.0
    %1632 = vmatpush1.msra.mxu0 0.0
    %1633 = vmatprep.subr.mxu0 0.0
    %1634 = vmatpush1.msra.mxu0 0.0
    %1635 = vmatprep.subr.mxu0 0.0
    %1636 = vmatpush1.msra.mxu0 0.0
    %1637 = vmatprep.subr.mxu0 0.0
    %1638 = vmatpush1.msra.mxu0 0.0
    %1639 = vmatprep.subr.mxu0 0.0
    %1640 = vmatpush1.msra.mxu0 0.0
    %1641 = vmatprep.subr.mxu0 0.0
    %1642 = vmatpush1.msra.mxu0 0.0
    %1643 = vmatprep.subr.mxu0 0.0
    %1644 = vmatpush1.msra.mxu0 0.0
    %1645 = vmatprep.subr.mxu0 0.0
    %1646 = vmatpush1.msra.mxu0 0.0
    %1647 = vmatprep.subr.mxu0 0.0
    %1648 = vmatpush1.msra.mxu0 0.0
    %1649 = vmatprep.subr.mxu0 0.0
    %1650 = vmatpush1.msra.mxu0 0.0
    %1651 = vmatprep.subr.mxu0 0.0
    %1652 = vmatpush1.msra.mxu0 0.0
    %1653 = vmatprep.subr.mxu0 0.0
    %1654 = vmatpush1.msra.mxu0 0.0
    %1655 = vmatprep.subr.mxu0 0.0
    %1656 = vmatpush1.msra.mxu0 0.0
    %1657 = vmatprep.subr.mxu0 0.0
    %1658 = vmatpush1.msra.mxu0 0.0
    %1659 = vmatprep.subr.mxu0 0.0
    %1660 = vmatpush1.msra.mxu0 0.0
    %1661 = vmatprep.subr.mxu0 0.0
    %1662 = vmatpush1.msra.mxu0 0.0
    %1663 = vmatprep.subr.mxu0 0.0
    %1664 = vmatpush1.msra.mxu0 0.0
    %1665 = vmatprep.subr.mxu0 0.0
    %1666 = vmatpush1.msra.mxu0 0.0
    %1667 = vmatprep.subr.mxu0 0.0
    %1668 = vmatpush1.msra.mxu0 0.0
    %1669 = vmatprep.mubr.f32.mxu0 0.0
    %1670 = vmatmul.mubr.f32.gmra.mrb[0].mxu0 %v1603
    %v1671 = vpop.f32.mrb[0].mxu0
    %v1672 = vadd.f32 0.0, %v1671
    %v1673 = vpop.f32.mrb[0].mxu0
    %v1674 = vadd.f32 0.0, %v1673
    %1675 = vdwg.mxu0
    %v1676 = vadd.f32 %v1193, %v1672
    %v1677 = vadd.f32 %v1194, %v1674
    %v1678 = vxor.u32 %v1676, 2147483648
    %v1679 = vmul.f32 %v1678, 1.442695
    %v1680 = vpow.pop %v1679
    %v1681 = vadd.f32 %v1680, 1.0
    %v1682 = vrcp.pop %v1681
    %v1683 = vmul.f32 1.0, %v1682
    %v1684 = vtanh.pop %v1677
    %v1685 = vxor.u32 %v1677, 2147483648
    %v1686 = vmul.f32 %v1685, 1.442695
    %v1687 = vpow.pop %v1686
    %v1688 = vadd.f32 %v1687, 1.0
    %v1689 = vrcp.pop %v1688
    %v1690 = vmul.f32 1.0, %v1689
    %v1691 = vmul.f32 %v1683, %v1597
    %v1692 = vmul.f32 %v1683, %v1684
    %1694 = vrot.lane.b32.xlu0 %v1692, 64
    %v1695 = vpop.permute.xlu0 %1694
    %v1697 = vadd.f32 %v1691, %v1695
    %v1698 = vtanh.pop %v1697
    %v1699 = vmul.f32 %v1690, %v1698
    %1701 = vrot.lane.b32.xlu0 %v1699, 64
    %v1702 = vpop.permute.xlu0 %1701
    %v1703 = vsel %vm190, %v1702, 0
    %1705 = vmatprep.subr.mxu0 %v1044
    %1706 = vmatpush1.msra.mxu0 %v1043
    %1707 = vmatprep.subr.mxu0 %v1046
    %1708 = vmatpush1.msra.mxu0 %v1045
    %1709 = vmatprep.subr.mxu0 %v1048
    %1710 = vmatpush1.msra.mxu0 %v1047
    %1711 = vmatprep.subr.mxu0 %v1050
    %1712 = vmatpush1.msra.mxu0 %v1049
    %1713 = vmatprep.subr.mxu0 %v1052
    %1714 = vmatpush1.msra.mxu0 %v1051
    %1715 = vmatprep.subr.mxu0 %v1054
    %1716 = vmatpush1.msra.mxu0 %v1053
    %1717 = vmatprep.subr.mxu0 %v1056
    %1718 = vmatpush1.msra.mxu0 %v1055
    %1719 = vmatprep.subr.mxu0 %v1058
    %1720 = vmatpush1.msra.mxu0 %v1057
    %1721 = vmatprep.subr.mxu0 0.0
    %1722 = vmatpush1.msra.mxu0 0.0
    %1723 = vmatprep.subr.mxu0 0.0
    %1724 = vmatpush1.msra.mxu0 0.0
    %1725 = vmatprep.subr.mxu0 0.0
    %1726 = vmatpush1.msra.mxu0 0.0
    %1727 = vmatprep.subr.mxu0 0.0
    %1728 = vmatpush1.msra.mxu0 0.0
    %1729 = vmatprep.subr.mxu0 0.0
    %1730 = vmatpush1.msra.mxu0 0.0
    %1731 = vmatprep.subr.mxu0 0.0
    %1732 = vmatpush1.msra.mxu0 0.0
    %1733 = vmatprep.subr.mxu0 0.0
    %1734 = vmatpush1.msra.mxu0 0.0
    %1735 = vmatprep.subr.mxu0 0.0
    %1736 = vmatpush1.msra.mxu0 0.0
    %1737 = vmatprep.subr.mxu0 0.0
    %1738 = vmatpush1.msra.mxu0 0.0
    %1739 = vmatprep.subr.mxu0 0.0
    %1740 = vmatpush1.msra.mxu0 0.0
    %1741 = vmatprep.subr.mxu0 0.0
    %1742 = vmatpush1.msra.mxu0 0.0
    %1743 = vmatprep.subr.mxu0 0.0
    %1744 = vmatpush1.msra.mxu0 0.0
    %1745 = vmatprep.subr.mxu0 0.0
    %1746 = vmatpush1.msra.mxu0 0.0
    %1747 = vmatprep.subr.mxu0 0.0
    %1748 = vmatpush1.msra.mxu0 0.0
    %1749 = vmatprep.subr.mxu0 0.0
    %1750 = vmatpush1.msra.mxu0 0.0
    %1751 = vmatprep.subr.mxu0 0.0
    %1752 = vmatpush1.msra.mxu0 0.0
    %1753 = vmatprep.subr.mxu0 0.0
    %1754 = vmatpush1.msra.mxu0 0.0
    %1755 = vmatprep.subr.mxu0 0.0
    %1756 = vmatpush1.msra.mxu0 0.0
    %1757 = vmatprep.subr.mxu0 0.0
    %1758 = vmatpush1.msra.mxu0 0.0
    %1759 = vmatprep.subr.mxu0 0.0
    %1760 = vmatpush1.msra.mxu0 0.0
    %1761 = vmatprep.subr.mxu0 0.0
    %1762 = vmatpush1.msra.mxu0 0.0
    %1763 = vmatprep.subr.mxu0 0.0
    %1764 = vmatpush1.msra.mxu0 0.0
    %1765 = vmatprep.subr.mxu0 0.0
    %1766 = vmatpush1.msra.mxu0 0.0
    %1767 = vmatprep.subr.mxu0 0.0
    %1768 = vmatpush1.msra.mxu0 0.0
    %1769 = vmatprep.mubr.f32.mxu0 0.0
    %1770 = vmatmul.mubr.f32.gmra.mrb[0].mxu0 %v1703
    %v1771 = vpop.f32.mrb[0].mxu0
    %v1772 = vadd.f32 0.0, %v1771
    %v1773 = vpop.f32.mrb[0].mxu0
    %v1774 = vadd.f32 0.0, %v1773
    %1775 = vdwg.mxu0
    %v1776 = vadd.f32 %v1195, %v1772
    %v1777 = vadd.f32 %v1196, %v1774
    %v1778 = vxor.u32 %v1776, 2147483648
    %v1779 = vmul.f32 %v1778, 1.442695
    %v1780 = vpow.pop %v1779
    %v1781 = vadd.f32 %v1780, 1.0
    %v1782 = vrcp.pop %v1781
    %v1783 = vmul.f32 1.0, %v1782
    %v1784 = vtanh.pop %v1777
    %v1785 = vxor.u32 %v1777, 2147483648
    %v1786 = vmul.f32 %v1785, 1.442695
    %v1787 = vpow.pop %v1786
    %v1788 = vadd.f32 %v1787, 1.0
    %v1789 = vrcp.pop %v1788
    %v1790 = vmul.f32 1.0, %v1789
    %v1791 = vmul.f32 %v1783, %v1697
    %v1792 = vmul.f32 %v1783, %v1784
    %1794 = vrot.lane.b32.xlu0 %v1792, 64
    %v1795 = vpop.permute.xlu0 %1794
    %v1797 = vadd.f32 %v1791, %v1795
    %v1798 = vtanh.pop %v1797
    %v1799 = vmul.f32 %v1790, %v1798
    %1801 = vrot.lane.b32.xlu0 %v1799, 64
    %v1802 = vpop.permute.xlu0 %1801
    %v1803 = vsel %vm190, %v1802, 0
    %1805 = vmatprep.subr.mxu0 %v1044
    %1806 = vmatpush1.msra.mxu0 %v1043
    %1807 = vmatprep.subr.mxu0 %v1046
    %1808 = vmatpush1.msra.mxu0 %v1045
    %1809 = vmatprep.subr.mxu0 %v1048
    %1810 = vmatpush1.msra.mxu0 %v1047
    %1811 = vmatprep.subr.mxu0 %v1050
    %1812 = vmatpush1.msra.mxu0 %v1049
    %1813 = vmatprep.subr.mxu0 %v1052
    %1814 = vmatpush1.msra.mxu0 %v1051
    %1815 = vmatprep.subr.mxu0 %v1054
    %1816 = vmatpush1.msra.mxu0 %v1053
    %1817 = vmatprep.subr.mxu0 %v1056
    %1818 = vmatpush1.msra.mxu0 %v1055
    %1819 = vmatprep.subr.mxu0 %v1058
    %1820 = vmatpush1.msra.mxu0 %v1057
    %1821 = vmatprep.subr.mxu0 0.0
    %1822 = vmatpush1.msra.mxu0 0.0
    %1823 = vmatprep.subr.mxu0 0.0
    %1824 = vmatpush1.msra.mxu0 0.0
    %1825 = vmatprep.subr.mxu0 0.0
    %1826 = vmatpush1.msra.mxu0 0.0
    %1827 = vmatprep.subr.mxu0 0.0
    %1828 = vmatpush1.msra.mxu0 0.0
    %1829 = vmatprep.subr.mxu0 0.0
    %1830 = vmatpush1.msra.mxu0 0.0
    %1831 = vmatprep.subr.mxu0 0.0
    %1832 = vmatpush1.msra.mxu0 0.0
    %1833 = vmatprep.subr.mxu0 0.0
    %1834 = vmatpush1.msra.mxu0 0.0
    %1835 = vmatprep.subr.mxu0 0.0
    %1836 = vmatpush1.msra.mxu0 0.0
    %1837 = vmatprep.subr.mxu0 0.0
    %1838 = vmatpush1.msra.mxu0 0.0
    %1839 = vmatprep.subr.mxu0 0.0
    %1840 = vmatpush1.msra.mxu0 0.0
    %1841 = vmatprep.subr.mxu0 0.0
    %1842 = vmatpush1.msra.mxu0 0.0
    %1843 = vmatprep.subr.mxu0 0.0
    %1844 = vmatpush1.msra.mxu0 0.0
    %1845 = vmatprep.subr.mxu0 0.0
    %1846 = vmatpush1.msra.mxu0 0.0
    %1847 = vmatprep.subr.mxu0 0.0
    %1848 = vmatpush1.msra.mxu0 0.0
    %1849 = vmatprep.subr.mxu0 0.0
    %1850 = vmatpush1.msra.mxu0 0.0
    %1851 = vmatprep.subr.mxu0 0.0
    %1852 = vmatpush1.msra.mxu0 0.0
    %1853 = vmatprep.subr.mxu0 0.0
    %1854 = vmatpush1.msra.mxu0 0.0
    %1855 = vmatprep.subr.mxu0 0.0
    %1856 = vmatpush1.msra.mxu0 0.0
    %1857 = vmatprep.subr.mxu0 0.0
    %1858 = vmatpush1.msra.mxu0 0.0
    %1859 = vmatprep.subr.mxu0 0.0
    %1860 = vmatpush1.msra.mxu0 0.0
    %1861 = vmatprep.subr.mxu0 0.0
    %1862 = vmatpush1.msra.mxu0 0.0
    %1863 = vmatprep.subr.mxu0 0.0
    %1864 = vmatpush1.msra.mxu0 0.0
    %1865 = vmatprep.subr.mxu0 0.0
    %1866 = vmatpush1.msra.mxu0 0.0
    %1867 = vmatprep.subr.mxu0 0.0
    %1868 = vmatpush1.msra.mxu0 0.0
    %1869 = vmatprep.mubr.f32.mxu0 0.0
    %1870 = vmatmul.mubr.f32.gmra.mrb[0].mxu0 %v1803
    %v1871 = vpop.f32.mrb[0].mxu0
    %v1872 = vadd.f32 0.0, %v1871
    %v1873 = vpop.f32.mrb[0].mxu0
    %v1874 = vadd.f32 0.0, %v1873
    %1875 = vdwg.mxu0
    %v1876 = vadd.f32 %v1197, %v1872
    %v1877 = vadd.f32 %v1198, %v1874
    %v1878 = vxor.u32 %v1876, 2147483648
    %v1879 = vmul.f32 %v1878, 1.442695
    %v1880 = vpow.pop %v1879
    %v1881 = vadd.f32 %v1880, 1.0
    %v1882 = vrcp.pop %v1881
    %v1883 = vmul.f32 1.0, %v1882
    %v1884 = vtanh.pop %v1877
    %v1885 = vxor.u32 %v1877, 2147483648
    %v1886 = vmul.f32 %v1885, 1.442695
    %v1887 = vpow.pop %v1886
    %v1888 = vadd.f32 %v1887, 1.0
    %v1889 = vrcp.pop %v1888
    %v1890 = vmul.f32 1.0, %v1889
    %v1891 = vmul.f32 %v1883, %v1797
    %v1892 = vmul.f32 %v1883, %v1884
    %1894 = vrot.lane.b32.xlu0 %v1892, 64
    %v1895 = vpop.permute.xlu0 %1894
    %v1897 = vadd.f32 %v1891, %v1895
    %v1898 = vtanh.pop %v1897
    %v1899 = vmul.f32 %v1890, %v1898
    %1901 = vrot.lane.b32.xlu0 %v1899, 64
    %v1902 = vpop.permute.xlu0 %1901
    %v1903 = vsel %vm190, %v1902, 0
    %1905 = vmatprep.subr.mxu0 %v1044
    %1906 = vmatpush1.msra.mxu0 %v1043
    %1907 = vmatprep.subr.mxu0 %v1046
    %1908 = vmatpush1.msra.mxu0 %v1045
    %1909 = vmatprep.subr.mxu0 %v1048
    %1910 = vmatpush1.msra.mxu0 %v1047
    %1911 = vmatprep.subr.mxu0 %v1050
    %1912 = vmatpush1.msra.mxu0 %v1049
    %1913 = vmatprep.subr.mxu0 %v1052
    %1914 = vmatpush1.msra.mxu0 %v1051
    %1915 = vmatprep.subr.mxu0 %v1054
    %1916 = vmatpush1.msra.mxu0 %v1053
    %1917 = vmatprep.subr.mxu0 %v1056
    %1918 = vmatpush1.msra.mxu0 %v1055
    %1919 = vmatprep.subr.mxu0 %v1058
    %1920 = vmatpush1.msra.mxu0 %v1057
    %1921 = vmatprep.subr.mxu0 0.0
    %1922 = vmatpush1.msra.mxu0 0.0
    %1923 = vmatprep.subr.mxu0 0.0
    %1924 = vmatpush1.msra.mxu0 0.0
    %1925 = vmatprep.subr.mxu0 0.0
    %1926 = vmatpush1.msra.mxu0 0.0
    %1927 = vmatprep.subr.mxu0 0.0
    %1928 = vmatpush1.msra.mxu0 0.0
    %1929 = vmatprep.subr.mxu0 0.0
    %1930 = vmatpush1.msra.mxu0 0.0
    %1931 = vmatprep.subr.mxu0 0.0
    %1932 = vmatpush1.msra.mxu0 0.0
    %1933 = vmatprep.subr.mxu0 0.0
    %1934 = vmatpush1.msra.mxu0 0.0
    %1935 = vmatprep.subr.mxu0 0.0
    %1936 = vmatpush1.msra.mxu0 0.0
    %1937 = vmatprep.subr.mxu0 0.0
    %1938 = vmatpush1.msra.mxu0 0.0
    %1939 = vmatprep.subr.mxu0 0.0
    %1940 = vmatpush1.msra.mxu0 0.0
    %1941 = vmatprep.subr.mxu0 0.0
    %1942 = vmatpush1.msra.mxu0 0.0
    %1943 = vmatprep.subr.mxu0 0.0
    %1944 = vmatpush1.msra.mxu0 0.0
    %1945 = vmatprep.subr.mxu0 0.0
    %1946 = vmatpush1.msra.mxu0 0.0
    %1947 = vmatprep.subr.mxu0 0.0
    %1948 = vmatpush1.msra.mxu0 0.0
    %1949 = vmatprep.subr.mxu0 0.0
    %1950 = vmatpush1.msra.mxu0 0.0
    %1951 = vmatprep.subr.mxu0 0.0
    %1952 = vmatpush1.msra.mxu0 0.0
    %1953 = vmatprep.subr.mxu0 0.0
    %1954 = vmatpush1.msra.mxu0 0.0
    %1955 = vmatprep.subr.mxu0 0.0
    %1956 = vmatpush1.msra.mxu0 0.0
    %1957 = vmatprep.subr.mxu0 0.0
    %1958 = vmatpush1.msra.mxu0 0.0
    %1959 = vmatprep.subr.mxu0 0.0
    %1960 = vmatpush1.msra.mxu0 0.0
    %1961 = vmatprep.subr.mxu0 0.0
    %1962 = vmatpush1.msra.mxu0 0.0
    %1963 = vmatprep.subr.mxu0 0.0
    %1964 = vmatpush1.msra.mxu0 0.0
    %1965 = vmatprep.subr.mxu0 0.0
    %1966 = vmatpush1.msra.mxu0 0.0
    %1967 = vmatprep.subr.mxu0 0.0
    %1968 = vmatpush1.msra.mxu0 0.0
    %1969 = vmatprep.mubr.f32.mxu0 0.0
    %1970 = vmatmul.mubr.f32.gmra.mrb[0].mxu0 %v1903
    %v1971 = vpop.f32.mrb[0].mxu0
    %v1972 = vadd.f32 0.0, %v1971
    %v1973 = vpop.f32.mrb[0].mxu0
    %v1974 = vadd.f32 0.0, %v1973
    %1975 = vdwg.mxu0
    %v1976 = vadd.f32 %v1203, %v1972
    %v1977 = vadd.f32 %v1204, %v1974
    %v1978 = vxor.u32 %v1976, 2147483648
    %v1979 = vmul.f32 %v1978, 1.442695
    %v1980 = vpow.pop %v1979
    %v1981 = vadd.f32 %v1980, 1.0
    %v1982 = vrcp.pop %v1981
    %v1983 = vmul.f32 1.0, %v1982
    %v1984 = vtanh.pop %v1977
    %v1985 = vxor.u32 %v1977, 2147483648
    %v1986 = vmul.f32 %v1985, 1.442695
    %v1987 = vpow.pop %v1986
    %v1988 = vadd.f32 %v1987, 1.0
    %v1989 = vrcp.pop %v1988
    %v1990 = vmul.f32 1.0, %v1989
    %v1991 = vmul.f32 %v1983, %v1897
    %v1992 = vmul.f32 %v1983, %v1984
    %1994 = vrot.lane.b32.xlu0 %v1992, 64
    %v1995 = vpop.permute.xlu0 %1994
    %v1997 = vadd.f32 %v1991, %v1995
    %v1998 = vtanh.pop %v1997
    %v1999 = vmul.f32 %v1990, %v1998
    %v2000 = vrot.slane %v1399, 7
    %v2002 = vrot.slane %v1499, 6
    %v2004 = vrot.slane %v1599, 5
    %v2006 = vrot.slane %v1699, 4
    %v2008 = vrot.slane %v1799, 3
    %v2010 = vrot.slane %v1899, 2
    %v2013 = vrot.slane %v1999, 1
    %v2015 = vsel %vm151, %v1299, %v2000
    %v2016 = vsel %vm1005, %v2015, %v2002
    %v2017 = vsel %vm1007, %v2016, %v2004
    %v2018 = vsel %vm1009, %v2017, %v2006
    %v2019 = vsel %vm1011, %v2018, %v2008
    %v2020 = vsel %vm1013, %v2019, %v2010
    %v2021 = vsel %vm1015, %v2020, %v2013
    %v2022 = vrot.slane %v1799, 7
    %v2024 = vrot.slane %v1699, 6
    %v2026 = vrot.slane %v1499, 4
    %v2028 = vrot.slane %v1399, 3
    %v2030 = vrot.slane %v1299, 2
    %v2032 = vsel %vm151, %v2013, %v1899
    %v2033 = vsel %vm1005, %v2032, %v2022
    %v2034 = vsel %vm1007, %v2033, %v2024
    %v2035 = vsel %vm1009, %v2034, %v2004
    %v2036 = vsel %vm1011, %v2035, %v2026
    %v2037 = vsel %vm1013, %v2036, %v2028
    %v2038 = vsel %vm1015, %v2037, %v2030
    %2040 = vrot.lane.b32.xlu0 %v2021, 64
    %v2041 = vpop.permute.xlu0 %2040
    %2044 = vrot.lane.b32.xlu0 %v2038, 64
    %v2045 = vpop.permute.xlu0 %2044
    %v2047 = vsel %vm70, %v2041, %v2045
    %v2048 = vld [vmem:[%s7] sm:$0xff]
    %v2049 = vld [vmem:[%s7 + $0x8] sm:$0xff]
    %v2050 = vld [vmem:[%s7 + $0x10] sm:$0xff]
    %v2051 = vld [vmem:[%s7 + $0x18] sm:$0xff]
    %v2052 = vld [vmem:[%s7 + $0x20] sm:$0xff]
    %v2053 = vld [vmem:[%s7 + $0x28] sm:$0xff]
    %v2054 = vld [vmem:[%s7 + $0x30] sm:$0xff]
    %v2055 = vld [vmem:[%s7 + $0x38] sm:$0xff]
    %v2056 = vld [vmem:[%s8] sm:$0x1]
    %v2058 = vlaneseq
    %v2059 = vshrl.u32 %v2058, 7
    %v2060 = vsub.s32 0, %v2059
    %v2061 = vrot.slane %v2056, %v2060
    %v2064 = vsel %vm190, %v2047, 0
    %2066 = vmatprep.subr.mxu0 0.0
    %2067 = vmatpush1.msra.mxu0 %v2048
    %2068 = vmatprep.subr.mxu0 0.0
    %2069 = vmatpush1.msra.mxu0 %v2049
    %2070 = vmatprep.subr.mxu0 0.0
    %2071 = vmatpush1.msra.mxu0 %v2050
    %2072 = vmatprep.subr.mxu0 0.0
    %2073 = vmatpush1.msra.mxu0 %v2051
    %2074 = vmatprep.subr.mxu0 0.0
    %2075 = vmatpush1.msra.mxu0 %v2052
    %2076 = vmatprep.subr.mxu0 0.0
    %2077 = vmatpush1.msra.mxu0 %v2053
    %2078 = vmatprep.subr.mxu0 0.0
    %2079 = vmatpush1.msra.mxu0 %v2054
    %2080 = vmatprep.subr.mxu0 0.0
    %2081 = vmatpush1.msra.mxu0 %v2055
    %2082 = vmatprep.subr.mxu0 0.0
    %2083 = vmatpush1.msra.mxu0 0.0
    %2084 = vmatprep.subr.mxu0 0.0
    %2085 = vmatpush1.msra.mxu0 0.0
    %2086 = vmatprep.subr.mxu0 0.0
    %2087 = vmatpush1.msra.mxu0 0.0
    %2088 = vmatprep.subr.mxu0 0.0
    %2089 = vmatpush1.msra.mxu0 0.0
    %2090 = vmatprep.subr.mxu0 0.0
    %2091 = vmatpush1.msra.mxu0 0.0
    %2092 = vmatprep.subr.mxu0 0.0
    %2093 = vmatpush1.msra.mxu0 0.0
    %2094 = vmatprep.subr.mxu0 0.0
    %2095 = vmatpush1.msra.mxu0 0.0
    %2096 = vmatprep.subr.mxu0 0.0
    %2097 = vmatpush1.msra.mxu0 0.0
    %2098 = vmatprep.subr.mxu0 0.0
    %2099 = vmatpush1.msra.mxu0 0.0
    %2100 = vmatprep.subr.mxu0 0.0
    %2101 = vmatpush1.msra.mxu0 0.0
    %2102 = vmatprep.subr.mxu0 0.0
    %2103 = vmatpush1.msra.mxu0 0.0
    %2104 = vmatprep.subr.mxu0 0.0
    %2105 = vmatpush1.msra.mxu0 0.0
    %2106 = vmatprep.subr.mxu0 0.0
    %2107 = vmatpush1.msra.mxu0 0.0
    %2108 = vmatprep.subr.mxu0 0.0
    %2109 = vmatpush1.msra.mxu0 0.0
    %2110 = vmatprep.subr.mxu0 0.0
    %2111 = vmatpush1.msra.mxu0 0.0
    %2112 = vmatprep.subr.mxu0 0.0
    %2113 = vmatpush1.msra.mxu0 0.0
    %2114 = vmatprep.subr.mxu0 0.0
    %2115 = vmatpush1.msra.mxu0 0.0
    %2116 = vmatprep.subr.mxu0 0.0
    %2117 = vmatpush1.msra.mxu0 0.0
    %2118 = vmatprep.subr.mxu0 0.0
    %2119 = vmatpush1.msra.mxu0 0.0
    %2120 = vmatprep.subr.mxu0 0.0
    %2121 = vmatpush1.msra.mxu0 0.0
    %2122 = vmatprep.subr.mxu0 0.0
    %2123 = vmatpush1.msra.mxu0 0.0
    %2124 = vmatprep.subr.mxu0 0.0
    %2125 = vmatpush1.msra.mxu0 0.0
    %2126 = vmatprep.subr.mxu0 0.0
    %2127 = vmatpush1.msra.mxu0 0.0
    %2128 = vmatprep.subr.mxu0 0.0
    %2129 = vmatpush1.msra.mxu0 0.0
    %2130 = vmatprep.mubr.f32.mxu0 0.0
    %2131 = vmatmul.mubr.f32.gmra.mrb[0].mxu0 %v2064
    %v2132 = vpop.f32.mrb[0].mxu0
    %v2133 = vadd.f32 %v2061, %v2132
    %v2134 = vpop.f32.mrb[0].mxu0
    %2135 = vdwg.mxu0
    %vm2136 = vcmask 130048
    %v2137 = vsel %vm2136, %v2133, -inf
    %2138 = vmax.xlane.f32.xlu0 %v2137
    %v2139 = vpop.xlane.xlu0 %2138
    %v2140 = vsub.f32 %v2133, %v2139
    %v2141 = vmul.f32 %v2140, 1.442695
    %v2142 = vpow.pop %v2141
    %v2143 = vsel %vm2136, %v2142, 0.0
    %2144 = vadd.xlane.f32.xlu0 %v2143
    %v2145 = vpop.xlane.xlu0 %2144
    %v2146 = vlog2.pop %v2145
    %v2147 = vmul.f32 %v2146, 0.6931472
    %v2148 = vsub.f32 %v2140, %v2147
    %2149 = vst.msk [vmem:[#allocation2] sm:$0xff] %vm2136, %v2148
    // Predicated region
    $region38: #{soffritto_forward.1} parent=1 // pred_check
      _
    $region39: #{soffritto_forward.1} parent=1 // pred_check_branch
      %2151 = sbr.rel (0) target = $region41
    $region40: #{soffritto_forward.1} parent=1 // pred_region
      %s2153 = ssub.s32 128, 128
      %2154 = vsyncadd [#allocation3], %s2153
      %s2156 = sshll.u32 [#allocation2], 4
      %s2157 = int_to_ptr.vmem [resolvable:$true] %s2156
      %2159 = dma.vmem_to_hbm [thread:$0]  %s2157, 128, %s9, [#allocation3]
    $region41: #{soffritto_forward.1} parent=1 // pred_fallthru
      _
    // Predicated region
    $region42: #{soffritto_forward.1} parent=1 // pred_check
      _
    $region43: #{soffritto_forward.1} parent=1 // pred_check_branch
      %2161 = sbr.rel (0) target = $region45
    $region44: #{soffritto_forward.1} parent=1 // pred_region
      %2162 = dma.done [#allocation3], 128
    $region45: #{soffritto_forward.1} parent=1 // pred_fallthru
      _
    %2163 = vsyncpa [#allocation3], 1

</llo_original>
